<compile_context>
chip_gen: v7x
topology: tpu7x:2x2x1
jax: 0.10.0
libtpu: 0.0.40
codegen_flags: <defaults>
</compile_context>

<pallas_src>
import functools
import math

import jax
import jax.numpy as jnp
import numpy as np
from jax import lax
from jax.experimental import pallas as pl
from jax.experimental.pallas import tpu as pltpu

# Finite "minus infinity": exp(NEG_LARGE - m_new) == 0 exactly, never NaN.
NEG_LARGE = -1e30


def _fused_causal_attn_kernel(
    # scalar-prefetch (SMEM) schedule tables, shape (n_steps,)
    qi_tbl, ki_tbl,
    # inputs
    x_ref,                      # (block, D) f32   current q tile (== kv tile on the diagonal)
    gamma_ref, beta_ref,        # (1, D)     f32   LayerNorm affine
    wq_ref, wk_ref, wv_ref,     # (D, HD)    bf16  flat, lane-dense projection weights
    bq_ref, bk_ref, bv_ref,     # (1, HD)    f32
    wo_ref,                     # (HD, D)    bf16
    bo_ref,                     # (1, D)     f32
    # output
    o_ref,                      # (block, D)
    # scratch (persistent across grid steps)
    q_scratch,                  # (block, HD)        bf16  scaled Q of the current q tile
    k_cache, v_cache,           # (nq, block, HD)    bf16  per-kv-tile K/V cache
    m_scratch, l_scratch,       # (H, block, 1)      f32   online-softmax max / denom
    acc_scratch,                # (H, block, dh)     f32   per-head output accumulator
    *, n_heads, d_head, block):

  t = pl.program_id(1)
  qi = qi_tbl[t]
  ki = ki_tbl[t]
  scale = 1.0 / math.sqrt(d_head)

  def flash_step(k_flat, v_flat, masked):
    """One online-softmax update of every head against one (block, HD) K/V tile."""
    q_flat = q_scratch[...]                                        # (block, HD) bf16
    if masked:  # causal mask is only ever needed on the diagonal tile
      row = lax.broadcasted_iota(jnp.int32, (block, block), 0)
      col = lax.broadcasted_iota(jnp.int32, (block, block), 1)
      keep = col <= row                                            # local indices suffice
    for h in range(n_heads):                                       # statically unrolled
      sl = slice(h * d_head, (h + 1) * d_head)
      s = lax.dot_general(q_flat[:, sl], k_flat[:, sl],
                          (((1,), (1,)), ((), ())),
                          preferred_element_type=jnp.float32)      # (block, block) f32
      if masked:
        s = jnp.where(keep, s, NEG_LARGE)
      m_prev = m_scratch[h]                                        # (block, 1)
      m_new = jnp.maximum(m_prev, jnp.max(s, axis=-1, keepdims=True))
      alpha = jnp.exp(m_prev - m_new)
      # exp kept in f32 (portable: v5e has no bf16 EUP path).
      p = jnp.exp(s - m_new)
      l_scratch[h] = alpha * l_scratch[h] + jnp.sum(p, axis=-1, keepdims=True)
      acc_scratch[h] = alpha * acc_scratch[h] + jnp.dot(
          p.astype(jnp.bfloat16), v_flat[:, sl],
          preferred_element_type=jnp.float32)                      # (block, dh)
      m_scratch[h] = m_new

  # ---- diagonal step: first kv step of every q tile (descending-ki schedule) ----
  # LayerNorm + lane-dense Q/K/V projections run here exactly once per tile; K/V of
  # tile ki(==qi) are cached in VMEM and reused by every later q tile (and by every
  # batch element in turn, since each tile is rewritten at its diagonal per batch).
  @pl.when(ki == qi)
  def _diag():
    x = x_ref[...]
    mean = jnp.mean(x, axis=-1, keepdims=True)
    xc = x - mean
    var = jnp.mean(xc * xc, axis=-1, keepdims=True)
    xn = xc * lax.rsqrt(var + 1e-5) * gamma_ref[...] + beta_ref[...]
    xn = xn.astype(jnp.bfloat16)

    # Flat (block, D) @ (D, HD) matmuls: full MXU lane width, no per-head broadcast.
    q = (jnp.dot(xn, wq_ref[...], preferred_element_type=jnp.float32)
         + bq_ref[...]) * scale                                    # fold 1/sqrt(dh) into Q
    k = jnp.dot(xn, wk_ref[...], preferred_element_type=jnp.float32) + bk_ref[...]
    v = jnp.dot(xn, wv_ref[...], preferred_element_type=jnp.float32) + bv_ref[...]

    q_scratch[...] = q.astype(jnp.bfloat16)
    k_bf = k.astype(jnp.bfloat16)
    v_bf = v.astype(jnp.bfloat16)
    k_cache[ki] = k_bf
    v_cache[ki] = v_bf

    m_scratch[...] = jnp.full(m_scratch.shape, NEG_LARGE, m_scratch.dtype)
    l_scratch[...] = jnp.zeros(l_scratch.shape, l_scratch.dtype)
    acc_scratch[...] = jnp.zeros(acc_scratch.shape, acc_scratch.dtype)

    flash_step(k_bf, v_bf, masked=True)          # only the diagonal tile is masked

  # ---- strictly-below-diagonal steps: K/V come from the VMEM cache, no mask ----
  @pl.when(ki < qi)
  def _below_diag():
    flash_step(k_cache[ki], v_cache[ki], masked=False)

  # ---- last kv step (ki == 0): normalize, single flat output projection, write ----
  @pl.when(ki == 0)
  def _finalize():
    outs = []
    for h in range(n_heads):
      inv_l = pl.reciprocal(l_scratch[h], approx=False)            # exact (review note)
      outs.append((acc_scratch[h] * inv_l).astype(jnp.bfloat16))
    att = jnp.concatenate(outs, axis=-1)                           # (block, HD) bf16
    # dropout(att) / dropout(out): identity at inference
    y = jnp.dot(att, wo_ref[...], preferred_element_type=jnp.float32) + bo_ref[...]
    o_ref[...] = y.astype(o_ref.dtype)


def prepare_params(params):
  """One-time parameter preparation (dtype casts) — hoisted out of the call path."""
  bf16, f32 = jnp.bfloat16, jnp.float32
  return {
      "gamma": params["gamma"].astype(f32).reshape(1, -1),
      "beta":  params["beta"].astype(f32).reshape(1, -1),
      "wq": params["wq"].astype(bf16), "bq": params["bq"].astype(f32).reshape(1, -1),
      "wk": params["wk"].astype(bf16), "bk": params["bk"].astype(f32).reshape(1, -1),
      "wv": params["wv"].astype(bf16), "bv": params["bv"].astype(f32).reshape(1, -1),
      "wo": params["wo"].astype(bf16), "bo": params["bo"].astype(f32).reshape(1, -1),
  }


def causal_self_attention(x, params, *, n_heads, d_head, block=None,
                          vmem_limit_bytes=48 * 1024 * 1024):
  """x: (B, N, D) float32.  params: prepare_params() output."""
  B, N, D = x.shape
  HD = n_heads * d_head
  assert params["wq"].shape == (D, HD) and params["wo"].shape == (HD, D)

  if block is None:
    # 128 fills the MXU on v5e and fits comfortably in v7x's 64 MiB VMEM.
    # On v6e (256-wide MXU, 128 MiB VMEM) block=256 + vmem_limit ~64-96 MiB is better.
    block = min(N, 128)
  assert N % block == 0, "sequence length must be divisible by the tile size"
  nq = N // block

  # Triangular schedule over the causal lower triangle (~2x fewer grid steps than a
  # dense (nq, nk) grid).  Within each q tile ki DESCENDS from the diagonal, so the
  # first step of a tile computes/caches its K/V and the last step (ki == 0) finalizes.
  qi_l, ki_l = [], []
  for qi in range(nq):
    for ki in range(qi, -1, -1):
      qi_l.append(qi)
      ki_l.append(ki)
  qi_tbl = jnp.asarray(qi_l, dtype=jnp.int32)
  ki_tbl = jnp.asarray(ki_l, dtype=jnp.int32)
  n_steps = len(qi_l)

  kernel = functools.partial(_fused_causal_attn_kernel,
                             n_heads=n_heads, d_head=d_head, block=block)

  # Grid-invariant params: full-array blocks with a constant index map (fetched once;
  # with flat bf16 weights the resident footprint is half of the old head-major layout).
  def rep(shape):
    return pl.BlockSpec(shape, lambda b, t, qt, kt: (0,) * len(shape))

  x_spec = pl.BlockSpec((None, block, D), lambda b, t, qt, kt: (b, qt[t], 0))
  out_spec = pl.BlockSpec((None, block, D), lambda b, t, qt, kt: (b, qt[t], 0))

  # Advisory cost estimate reflecting the restructuring (x read once, projections once,
  # attention over the causal half only).
  proj_flops = 8 * B * N * D * HD
  attn_flops = 2 * B * HD * N * N
  transcendentals = B * n_heads * N * N // 2 + B * N
  bytes_accessed = (2 * B * N * D * 4          # x in, out
                    + 4 * D * HD * 2           # bf16 weights
                    + (3 * HD + 3 * D) * 4)    # biases + LN affine

  # TODO(synk): for very long sequences where the K/V cache (2 * N * HD bf16 bytes)
  # no longer fits the VMEM budget, move the LN+QKV projection into a separate
  # pallas_call and stream K/V tiles from HBM instead.
  return pl.pallas_call(
      kernel,
      out_shape=jax.ShapeDtypeStruct((B, N, D), x.dtype),
      grid_spec=pltpu.PrefetchScalarGridSpec(
          num_scalar_prefetch=2,
          grid=(B, n_steps),
          in_specs=[
              x_spec,
              rep((1, D)), rep((1, D)),                 # LN gamma, beta
              rep((D, HD)), rep((D, HD)), rep((D, HD)),  # Wq, Wk, Wv (flat, bf16)
              rep((1, HD)), rep((1, HD)), rep((1, HD)),  # bq, bk, bv
              rep((HD, D)), rep((1, D)),                 # Wo, bo
          ],
          out_specs=out_spec,
          scratch_shapes=[
              pltpu.VMEM((block, HD), jnp.bfloat16),           # scaled Q tile
              pltpu.VMEM((nq, block, HD), jnp.bfloat16),       # K cache (lane-dense)
              pltpu.VMEM((nq, block, HD), jnp.bfloat16),       # V cache (lane-dense)
              pltpu.VMEM((n_heads, block, 1), jnp.float32),    # running max
              pltpu.VMEM((n_heads, block, 1), jnp.float32),    # running denom
              pltpu.VMEM((n_heads, block, d_head), jnp.float32),  # per-head accumulator
          ]),
      compiler_params=pltpu.CompilerParams(
          # Batch stays a true 'parallel' axis so both v7x TensorCores are fed (B >= 2).
          dimension_semantics=("parallel", "arbitrary"),
          vmem_limit_bytes=vmem_limit_bytes),
      cost_estimate=pl.CostEstimate(
          flops=proj_flops + attn_flops,
          transcendentals=transcendentals,
          bytes_accessed=bytes_accessed),
  )(qi_tbl, ki_tbl, x,
    params["gamma"], params["beta"],
    params["wq"], params["wk"], params["wv"],
    params["bq"], params["bk"], params["bv"],
    params["wo"], params["bo"])


def reference(x, params, *, n_heads, d_head):
  """Pure-JAX f32 reference matching the PyTorch forward (dropout = identity)."""
  B, N, D = x.shape
  mean = jnp.mean(x, -1, keepdims=True)
  var = jnp.mean((x - mean) ** 2, -1, keepdims=True)
  xn = (x - mean) / jnp.sqrt(var + 1e-5) * params["gamma"][0] + params["beta"][0]
  q = (xn @ params["wq"] + params["bq"][0]).reshape(B, N, n_heads, d_head)
  k = (xn @ params["wk"] + params["bk"][0]).reshape(B, N, n_heads, d_head)
  v = (xn @ params["wv"] + params["bv"][0]).reshape(B, N, n_heads, d_head)
  scores = jnp.einsum("bihd,bjhd->bhij", q, k) / jnp.sqrt(jnp.float32(d_head))
  mask = jnp.tril(jnp.ones((N, N), bool))
  scores = jnp.where(mask[None, None], scores, -jnp.inf)
  att = jax.nn.softmax(scores, axis=-1)
  out = jnp.einsum("bhij,bjhd->bihd", att, v).reshape(B, N, n_heads * d_head)
  return out @ params["wo"] + params["bo"][0]


if __name__ == "__main__":
  # Small, module-consistent shapes; block=8 with N=32 gives nq=4 q tiles, so the
  # triangular schedule, the K/V cache reuse across q tiles, the diagonal-only
  # masking and the per-batch cache rebuild are all actually exercised.
  B, N = 2, 32          # batch, seq_len
  D = 32                # d_model
  n_heads, d_head = 2, 16
  HD = n_heads * d_head

  key = jax.random.PRNGKey(0)
  ks = jax.random.split(key, 10)
  s = 0.05
  params = {
      "gamma": jnp.ones((1, D), jnp.float32),
      "beta":  jnp.zeros((1, D), jnp.float32),
      "wq": jax.random.normal(ks[0], (D, HD), jnp.float32) * s,
      "bq": jax.random.normal(ks[1], (1, HD), jnp.float32) * s,
      "wk": jax.random.normal(ks[2], (D, HD), jnp.float32) * s,
      "bk": jax.random.normal(ks[3], (1, HD), jnp.float32) * s,
      "wv": jax.random.normal(ks[4], (D, HD), jnp.float32) * s,
      "bv": jax.random.normal(ks[5], (1, HD), jnp.float32) * s,
      "wo": jax.random.normal(ks[6], (HD, D), jnp.float32) * s,
      "bo": jax.random.normal(ks[7], (1, D), jnp.float32) * s,
  }
  x = jax.random.normal(ks[8], (B, N, D), jnp.float32)

  prepared = prepare_params(params)   # one-time weight prep (hoisted out of the call)
  y = causal_self_attention(x, prepared, n_heads=n_heads, d_head=d_head, block=8)
  y = jax.block_until_ready(y)

  y_ref = reference(x, params, n_heads=n_heads, d_head=d_head)
  # bf16 matmul operands with f32 accumulation -> looser tolerance than pure f32
  np.testing.assert_allclose(np.asarray(y), np.asarray(y_ref), atol=2e-2, rtol=2e-2)

  # TODO(synk): training-mode dropout is omitted (inference semantics); it would need
  # pltpu.prng_seed / prng_random_bits inside the kernel.
  print("KERNEL_OK")
</pallas_src>

<mosaic_0001>
module attributes {stable_mosaic.version = 11 : i64} {
  func.func @_fused_causal_attn_kernel(%arg0: i32, %arg1: i32, %arg2: memref<10xi32, #tpu.memory_space<smem>>, %arg3: memref<10xi32, #tpu.memory_space<smem>>, %arg4: memref<1x8x32xf32, #tpu.memory_space<vmem>>, %arg5: memref<1x32xf32, #tpu.memory_space<vmem>>, %arg6: memref<1x32xf32, #tpu.memory_space<vmem>>, %arg7: memref<32x32xbf16, #tpu.memory_space<vmem>>, %arg8: memref<32x32xbf16, #tpu.memory_space<vmem>>, %arg9: memref<32x32xbf16, #tpu.memory_space<vmem>>, %arg10: memref<1x32xf32, #tpu.memory_space<vmem>>, %arg11: memref<1x32xf32, #tpu.memory_space<vmem>>, %arg12: memref<1x32xf32, #tpu.memory_space<vmem>>, %arg13: memref<32x32xbf16, #tpu.memory_space<vmem>>, %arg14: memref<1x32xf32, #tpu.memory_space<vmem>>, %arg15: memref<1x8x32xf32, #tpu.memory_space<vmem>>, %arg16: memref<8x32xbf16, #tpu.memory_space<vmem>>, %arg17: memref<4x8x32xbf16, #tpu.memory_space<vmem>>, %arg18: memref<4x8x32xbf16, #tpu.memory_space<vmem>>, %arg19: memref<2x8x1xf32, #tpu.memory_space<vmem>>, %arg20: memref<2x8x1xf32, #tpu.memory_space<vmem>>, %arg21: memref<2x8x16xf32, #tpu.memory_space<vmem>>) attributes {dimension_semantics = [#tpu.dimension_semantics<parallel>, #tpu.dimension_semantics<arbitrary>], iteration_bounds = array<i64: 2, 10>, scalar_prefetch = 2 : i64, scratch_operands = 6 : i64, tpu.core_type = #tpu.core_type<tc>, window_params = [{transform_indices = @transform_0, window_bounds = array<i64: 1, 8, 32>}, {pipeline_mode = #tpu.pipeline_mode<synchronous>, transform_indices = @transform_1, window_bounds = array<i64: 1, 32>}, {pipeline_mode = #tpu.pipeline_mode<synchronous>, transform_indices = @transform_2, window_bounds = array<i64: 1, 32>}, {pipeline_mode = #tpu.pipeline_mode<synchronous>, transform_indices = @transform_3, window_bounds = array<i64: 32, 32>}, {pipeline_mode = #tpu.pipeline_mode<synchronous>, transform_indices = @transform_4, window_bounds = array<i64: 32, 32>}, {pipeline_mode = #tpu.pipeline_mode<synchronous>, transform_indices = @transform_5, window_bounds = array<i64: 32, 32>}, {pipeline_mode = #tpu.pipeline_mode<synchronous>, transform_indices = @transform_6, window_bounds = array<i64: 1, 32>}, {pipeline_mode = #tpu.pipeline_mode<synchronous>, transform_indices = @transform_7, window_bounds = array<i64: 1, 32>}, {pipeline_mode = #tpu.pipeline_mode<synchronous>, transform_indices = @transform_8, window_bounds = array<i64: 1, 32>}, {pipeline_mode = #tpu.pipeline_mode<synchronous>, transform_indices = @transform_9, window_bounds = array<i64: 32, 32>}, {pipeline_mode = #tpu.pipeline_mode<synchronous>, transform_indices = @transform_10, window_bounds = array<i64: 1, 32>}, {transform_indices = @transform_11, window_bounds = array<i64: 1, 8, 32>}]} {
    %0 = arith.index_cast %arg1 : i32 to index
    %1 = memref.load %arg2[%0] : memref<10xi32, #tpu.memory_space<smem>>
    %2 = arith.index_cast %arg1 : i32 to index
    %3 = memref.load %arg3[%2] : memref<10xi32, #tpu.memory_space<smem>>
    %4 = arith.cmpi eq, %3, %1 : i32
    %5 = arith.extui %4 : i1 to i32
    %c0_i32 = arith.constant 0 : i32
    %6 = arith.cmpi ne, %5, %c0_i32 : i32
    scf.if %6 {
      %c0 = arith.constant 0 : index
      %c0_3 = arith.constant 0 : index
      %c0_4 = arith.constant 0 : index
      %13 = vector.load %arg4[%c0, %c0_3, %c0_4] : memref<1x8x32xf32, #tpu.memory_space<vmem>>, vector<1x8x32xf32>
      %14 = vector.shape_cast %13 : vector<1x8x32xf32> to vector<8x32xf32>
      %cst = arith.constant dense<0.000000e+00> : vector<8xf32>
      %15 = vector.multi_reduction <add>, %14, %cst [1] : vector<8x32xf32> to vector<8xf32>
      %16 = vector.shape_cast %15 : vector<8xf32> to vector<8x1xf32>
      %cst_5 = arith.constant 3.200000e+01 : f32
      %17 = vector.broadcast %cst_5 : f32 to vector<8x1xf32>
      %18 = arith.divf %16, %17 : vector<8x1xf32>
      %19 = vector.broadcast %18 : vector<8x1xf32> to vector<8x32xf32>
      %20 = arith.subf %14, %19 : vector<8x32xf32>
      %21 = arith.mulf %20, %20 : vector<8x32xf32>
      %cst_6 = arith.constant dense<0.000000e+00> : vector<8xf32>
      %22 = vector.multi_reduction <add>, %21, %cst_6 [1] : vector<8x32xf32> to vector<8xf32>
      %23 = vector.shape_cast %22 : vector<8xf32> to vector<8x1xf32>
      %cst_7 = arith.constant 3.200000e+01 : f32
      %24 = vector.broadcast %cst_7 : f32 to vector<8x1xf32>
      %25 = arith.divf %23, %24 : vector<8x1xf32>
      %cst_8 = arith.constant 9.99999974E-6 : f32
      %26 = vector.broadcast %cst_8 : f32 to vector<8x1xf32>
      %27 = arith.addf %25, %26 : vector<8x1xf32>
      %28 = math.rsqrt %27 : vector<8x1xf32>
      %29 = vector.broadcast %28 : vector<8x1xf32> to vector<8x32xf32>
      %30 = arith.mulf %20, %29 : vector<8x32xf32>
      %c0_9 = arith.constant 0 : index
      %c0_10 = arith.constant 0 : index
      %31 = vector.load %arg5[%c0_9, %c0_10] : memref<1x32xf32, #tpu.memory_space<vmem>>, vector<1x32xf32>
      %32 = vector.broadcast %31 : vector<1x32xf32> to vector<8x32xf32>
      %33 = arith.mulf %30, %32 : vector<8x32xf32>
      %c0_11 = arith.constant 0 : index
      %c0_12 = arith.constant 0 : index
      %34 = vector.load %arg6[%c0_11, %c0_12] : memref<1x32xf32, #tpu.memory_space<vmem>>, vector<1x32xf32>
      %35 = vector.broadcast %34 : vector<1x32xf32> to vector<8x32xf32>
      %36 = arith.addf %33, %35 : vector<8x32xf32>
      %37 = arith.truncf %36 : vector<8x32xf32> to vector<8x32xbf16>
      %c0_13 = arith.constant 0 : index
      %c0_14 = arith.constant 0 : index
      %38 = vector.load %arg7[%c0_13, %c0_14] : memref<32x32xbf16, #tpu.memory_space<vmem>>, vector<32x32xbf16>
      %cst_15 = arith.constant dense<0.000000e+00> : vector<8x32xf32>
      %39 = tpu.matmul %37, %38, %cst_15 {dimension_numbers = #tpu.dot_dimension_numbers<[1], [0], [0], [1], [0, 0, 1, 1], [], []>} : vector<8x32xbf16>, vector<32x32xbf16>, vector<8x32xf32> -> vector<8x32xf32>
      %c0_16 = arith.constant 0 : index
      %c0_17 = arith.constant 0 : index
      %40 = vector.load %arg10[%c0_16, %c0_17] : memref<1x32xf32, #tpu.memory_space<vmem>>, vector<1x32xf32>
      %41 = vector.broadcast %40 : vector<1x32xf32> to vector<8x32xf32>
      %42 = arith.addf %39, %41 : vector<8x32xf32>
      %cst_18 = arith.constant 2.500000e-01 : f32
      %43 = vector.broadcast %cst_18 : f32 to vector<8x32xf32>
      %44 = arith.mulf %42, %43 : vector<8x32xf32>
      %c0_19 = arith.constant 0 : index
      %c0_20 = arith.constant 0 : index
      %45 = vector.load %arg8[%c0_19, %c0_20] : memref<32x32xbf16, #tpu.memory_space<vmem>>, vector<32x32xbf16>
      %cst_21 = arith.constant dense<0.000000e+00> : vector<8x32xf32>
      %46 = tpu.matmul %37, %45, %cst_21 {dimension_numbers = #tpu.dot_dimension_numbers<[1], [0], [0], [1], [0, 0, 1, 1], [], []>} : vector<8x32xbf16>, vector<32x32xbf16>, vector<8x32xf32> -> vector<8x32xf32>
      %c0_22 = arith.constant 0 : index
      %c0_23 = arith.constant 0 : index
      %47 = vector.load %arg11[%c0_22, %c0_23] : memref<1x32xf32, #tpu.memory_space<vmem>>, vector<1x32xf32>
      %48 = vector.broadcast %47 : vector<1x32xf32> to vector<8x32xf32>
      %49 = arith.addf %46, %48 : vector<8x32xf32>
      %c0_24 = arith.constant 0 : index
      %c0_25 = arith.constant 0 : index
      %50 = vector.load %arg9[%c0_24, %c0_25] : memref<32x32xbf16, #tpu.memory_space<vmem>>, vector<32x32xbf16>
      %cst_26 = arith.constant dense<0.000000e+00> : vector<8x32xf32>
      %51 = tpu.matmul %37, %50, %cst_26 {dimension_numbers = #tpu.dot_dimension_numbers<[1], [0], [0], [1], [0, 0, 1, 1], [], []>} : vector<8x32xbf16>, vector<32x32xbf16>, vector<8x32xf32> -> vector<8x32xf32>
      %c0_27 = arith.constant 0 : index
      %c0_28 = arith.constant 0 : index
      %52 = vector.load %arg12[%c0_27, %c0_28] : memref<1x32xf32, #tpu.memory_space<vmem>>, vector<1x32xf32>
      %53 = vector.broadcast %52 : vector<1x32xf32> to vector<8x32xf32>
      %54 = arith.addf %51, %53 : vector<8x32xf32>
      %55 = arith.truncf %44 : vector<8x32xf32> to vector<8x32xbf16>
      %c0_29 = arith.constant 0 : index
      %c0_30 = arith.constant 0 : index
      %56 = vector.load %arg16[%c0_29, %c0_30] : memref<8x32xbf16, #tpu.memory_space<vmem>>, vector<8x32xbf16>
      tpu.vector_store %arg16[%c0_29, %c0_30], %55 {strides = array<i32>} : memref<8x32xbf16, #tpu.memory_space<vmem>>, vector<8x32xbf16>,
      %57 = arith.truncf %49 : vector<8x32xf32> to vector<8x32xbf16>
      %58 = arith.truncf %54 : vector<8x32xf32> to vector<8x32xbf16>
      %59 = arith.index_cast %3 : i32 to index
      %c0_31 = arith.constant 0 : index
      %c0_32 = arith.constant 0 : index
      %60 = vector.load %arg17[%59, %c0_31, %c0_32] : memref<4x8x32xbf16, #tpu.memory_space<vmem>>, vector<1x8x32xbf16>
      %61 = vector.shape_cast %60 : vector<1x8x32xbf16> to vector<8x32xbf16>
      %62 = vector.shape_cast %57 : vector<8x32xbf16> to vector<1x8x32xbf16>
      tpu.vector_store %arg17[%59, %c0_31, %c0_32], %62 {strides = array<i32>} : memref<4x8x32xbf16, #tpu.memory_space<vmem>>, vector<1x8x32xbf16>,
      %63 = arith.index_cast %3 : i32 to index
      %c0_33 = arith.constant 0 : index
      %c0_34 = arith.constant 0 : index
      %64 = vector.load %arg18[%63, %c0_33, %c0_34] : memref<4x8x32xbf16, #tpu.memory_space<vmem>>, vector<1x8x32xbf16>
      %65 = vector.shape_cast %64 : vector<1x8x32xbf16> to vector<8x32xbf16>
      %66 = vector.shape_cast %58 : vector<8x32xbf16> to vector<1x8x32xbf16>
      tpu.vector_store %arg18[%63, %c0_33, %c0_34], %66 {strides = array<i32>} : memref<4x8x32xbf16, #tpu.memory_space<vmem>>, vector<1x8x32xbf16>,
      %cst_35 = arith.constant -1.000000e+30 : f32
      %67 = vector.broadcast %cst_35 : f32 to vector<2x8x1xf32>
      %c0_36 = arith.constant 0 : index
      %c0_37 = arith.constant 0 : index
      %c0_38 = arith.constant 0 : index
      %68 = vector.load %arg19[%c0_36, %c0_37, %c0_38] : memref<2x8x1xf32, #tpu.memory_space<vmem>>, vector<2x8x1xf32>
      tpu.vector_store %arg19[%c0_36, %c0_37, %c0_38], %67 {strides = array<i32>} : memref<2x8x1xf32, #tpu.memory_space<vmem>>, vector<2x8x1xf32>,
      %cst_39 = arith.constant 0.000000e+00 : f32
      %69 = vector.broadcast %cst_39 : f32 to vector<2x8x1xf32>
      %c0_40 = arith.constant 0 : index
      %c0_41 = arith.constant 0 : index
      %c0_42 = arith.constant 0 : index
      %70 = vector.load %arg20[%c0_40, %c0_41, %c0_42] : memref<2x8x1xf32, #tpu.memory_space<vmem>>, vector<2x8x1xf32>
      tpu.vector_store %arg20[%c0_40, %c0_41, %c0_42], %69 {strides = array<i32>} : memref<2x8x1xf32, #tpu.memory_space<vmem>>, vector<2x8x1xf32>,
      %cst_43 = arith.constant 0.000000e+00 : f32
      %71 = vector.broadcast %cst_43 : f32 to vector<2x8x16xf32>
      %c0_44 = arith.constant 0 : index
      %c0_45 = arith.constant 0 : index
      %c0_46 = arith.constant 0 : index
      %72 = vector.load %arg21[%c0_44, %c0_45, %c0_46] : memref<2x8x16xf32, #tpu.memory_space<vmem>>, vector<2x8x16xf32>
      tpu.vector_store %arg21[%c0_44, %c0_45, %c0_46], %71 {strides = array<i32>} : memref<2x8x16xf32, #tpu.memory_space<vmem>>, vector<2x8x16xf32>,
      %c0_47 = arith.constant 0 : index
      %c0_48 = arith.constant 0 : index
      %73 = vector.load %arg16[%c0_47, %c0_48] : memref<8x32xbf16, #tpu.memory_space<vmem>>, vector<8x32xbf16>
      %74 = tpu.iota {dimensions = array<i32: 0>} : vector<8x8xi32>
      %75 = tpu.iota {dimensions = array<i32: 1>} : vector<8x8xi32>
      %76 = arith.cmpi sle, %75, %74 : vector<8x8xi32>
      %77 = vector.extract_strided_slice %73 {offsets = [0, 0], sizes = [8, 16], strides = [1, 1]} : vector<8x32xbf16> to vector<8x16xbf16>
      %78 = vector.extract_strided_slice %57 {offsets = [0, 0], sizes = [8, 16], strides = [1, 1]} : vector<8x32xbf16> to vector<8x16xbf16>
      %cst_49 = arith.constant dense<0.000000e+00> : vector<8x8xf32>
      %79 = tpu.matmul %77, %78, %cst_49 {dimension_numbers = #tpu.dot_dimension_numbers<[1], [1], [0], [0], [0, 0, 1, 0], [], []>} : vector<8x16xbf16>, vector<8x16xbf16>, vector<8x8xf32> -> vector<8x8xf32>
      %cst_50 = arith.constant -1.000000e+30 : f32
      %80 = vector.broadcast %cst_50 : f32 to vector<8x8xf32>
      %81 = arith.select %76, %79, %80 : vector<8x8xi1>, vector<8x8xf32>
      %c0_51 = arith.constant 0 : index
      %c0_52 = arith.constant 0 : index
      %c0_53 = arith.constant 0 : index
      %82 = vector.load %arg19[%c0_51, %c0_52, %c0_53] : memref<2x8x1xf32, #tpu.memory_space<vmem>>, vector<1x8x1xf32>
      %83 = vector.shape_cast %82 : vector<1x8x1xf32> to vector<8x1xf32>
      %cst_54 = arith.constant dense<0xFF800000> : vector<8xf32>
      %84 = vector.multi_reduction <maximumf>, %81, %cst_54 [1] : vector<8x8xf32> to vector<8xf32>
      %85 = vector.shape_cast %84 : vector<8xf32> to vector<8x1xf32>
      %86 = arith.maximumf %83, %85 : vector<8x1xf32>
      %87 = arith.subf %83, %86 : vector<8x1xf32>
      %88 = math.exp %87 : vector<8x1xf32>
      %89 = vector.broadcast %86 : vector<8x1xf32> to vector<8x8xf32>
      %90 = arith.subf %81, %89 : vector<8x8xf32>
      %91 = math.exp %90 : vector<8x8xf32>
      %c0_55 = arith.constant 0 : index
      %c0_56 = arith.constant 0 : index
      %c0_57 = arith.constant 0 : index
      %92 = vector.load %arg20[%c0_55, %c0_56, %c0_57] : memref<2x8x1xf32, #tpu.memory_space<vmem>>, vector<1x8x1xf32>
      %93 = vector.shape_cast %92 : vector<1x8x1xf32> to vector<8x1xf32>
      %94 = arith.mulf %88, %93 : vector<8x1xf32>
      %cst_58 = arith.constant dense<0.000000e+00> : vector<8xf32>
      %95 = vector.multi_reduction <add>, %91, %cst_58 [1] : vector<8x8xf32> to vector<8xf32>
      %96 = vector.shape_cast %95 : vector<8xf32> to vector<8x1xf32>
      %97 = arith.addf %94, %96 : vector<8x1xf32>
      %c0_59 = arith.constant 0 : index
      %c0_60 = arith.constant 0 : index
      %c0_61 = arith.constant 0 : index
      %98 = vector.load %arg20[%c0_59, %c0_60, %c0_61] : memref<2x8x1xf32, #tpu.memory_space<vmem>>, vector<1x8x1xf32>
      %99 = vector.shape_cast %98 : vector<1x8x1xf32> to vector<8x1xf32>
      %100 = vector.shape_cast %97 : vector<8x1xf32> to vector<1x8x1xf32>
      tpu.vector_store %arg20[%c0_59, %c0_60, %c0_61], %100 {strides = array<i32>} : memref<2x8x1xf32, #tpu.memory_space<vmem>>, vector<1x8x1xf32>,
      %c0_62 = arith.constant 0 : index
      %c0_63 = arith.constant 0 : index
      %c0_64 = arith.constant 0 : index
      %101 = vector.load %arg21[%c0_62, %c0_63, %c0_64] : memref<2x8x16xf32, #tpu.memory_space<vmem>>, vector<1x8x16xf32>
      %102 = vector.shape_cast %101 : vector<1x8x16xf32> to vector<8x16xf32>
      %103 = vector.broadcast %88 : vector<8x1xf32> to vector<8x16xf32>
      %104 = arith.mulf %103, %102 : vector<8x16xf32>
      %105 = arith.truncf %91 : vector<8x8xf32> to vector<8x8xbf16>
      %106 = vector.extract_strided_slice %58 {offsets = [0, 0], sizes = [8, 16], strides = [1, 1]} : vector<8x32xbf16> to vector<8x16xbf16>
      %cst_65 = arith.constant dense<0.000000e+00> : vector<8x16xf32>
      %107 = tpu.matmul %105, %106, %cst_65 {dimension_numbers = #tpu.dot_dimension_numbers<[1], [0], [0], [1], [0, 0, 1, 1], [], []>} : vector<8x8xbf16>, vector<8x16xbf16>, vector<8x16xf32> -> vector<8x16xf32>
      %108 = arith.addf %104, %107 : vector<8x16xf32>
      %c0_66 = arith.constant 0 : index
      %c0_67 = arith.constant 0 : index
      %c0_68 = arith.constant 0 : index
      %109 = vector.load %arg21[%c0_66, %c0_67, %c0_68] : memref<2x8x16xf32, #tpu.memory_space<vmem>>, vector<1x8x16xf32>
      %110 = vector.shape_cast %109 : vector<1x8x16xf32> to vector<8x16xf32>
      %111 = vector.shape_cast %108 : vector<8x16xf32> to vector<1x8x16xf32>
      tpu.vector_store %arg21[%c0_66, %c0_67, %c0_68], %111 {strides = array<i32>} : memref<2x8x16xf32, #tpu.memory_space<vmem>>, vector<1x8x16xf32>,
      %c0_69 = arith.constant 0 : index
      %c0_70 = arith.constant 0 : index
      %c0_71 = arith.constant 0 : index
      %112 = vector.load %arg19[%c0_69, %c0_70, %c0_71] : memref<2x8x1xf32, #tpu.memory_space<vmem>>, vector<1x8x1xf32>
      %113 = vector.shape_cast %112 : vector<1x8x1xf32> to vector<8x1xf32>
      %114 = vector.shape_cast %86 : vector<8x1xf32> to vector<1x8x1xf32>
      tpu.vector_store %arg19[%c0_69, %c0_70, %c0_71], %114 {strides = array<i32>} : memref<2x8x1xf32, #tpu.memory_space<vmem>>, vector<1x8x1xf32>,
      %115 = vector.extract_strided_slice %73 {offsets = [0, 16], sizes = [8, 16], strides = [1, 1]} : vector<8x32xbf16> to vector<8x16xbf16>
      %116 = vector.extract_strided_slice %57 {offsets = [0, 16], sizes = [8, 16], strides = [1, 1]} : vector<8x32xbf16> to vector<8x16xbf16>
      %cst_72 = arith.constant dense<0.000000e+00> : vector<8x8xf32>
      %117 = tpu.matmul %115, %116, %cst_72 {dimension_numbers = #tpu.dot_dimension_numbers<[1], [1], [0], [0], [0, 0, 1, 0], [], []>} : vector<8x16xbf16>, vector<8x16xbf16>, vector<8x8xf32> -> vector<8x8xf32>
      %cst_73 = arith.constant -1.000000e+30 : f32
      %118 = vector.broadcast %cst_73 : f32 to vector<8x8xf32>
      %119 = arith.select %76, %117, %118 : vector<8x8xi1>, vector<8x8xf32>
      %c1 = arith.constant 1 : index
      %c0_74 = arith.constant 0 : index
      %c0_75 = arith.constant 0 : index
      %120 = vector.load %arg19[%c1, %c0_74, %c0_75] : memref<2x8x1xf32, #tpu.memory_space<vmem>>, vector<1x8x1xf32>
      %121 = vector.shape_cast %120 : vector<1x8x1xf32> to vector<8x1xf32>
      %cst_76 = arith.constant dense<0xFF800000> : vector<8xf32>
      %122 = vector.multi_reduction <maximumf>, %119, %cst_76 [1] : vector<8x8xf32> to vector<8xf32>
      %123 = vector.shape_cast %122 : vector<8xf32> to vector<8x1xf32>
      %124 = arith.maximumf %121, %123 : vector<8x1xf32>
      %125 = arith.subf %121, %124 : vector<8x1xf32>
      %126 = math.exp %125 : vector<8x1xf32>
      %127 = vector.broadcast %124 : vector<8x1xf32> to vector<8x8xf32>
      %128 = arith.subf %119, %127 : vector<8x8xf32>
      %129 = math.exp %128 : vector<8x8xf32>
      %c1_77 = arith.constant 1 : index
      %c0_78 = arith.constant 0 : index
      %c0_79 = arith.constant 0 : index
      %130 = vector.load %arg20[%c1_77, %c0_78, %c0_79] : memref<2x8x1xf32, #tpu.memory_space<vmem>>, vector<1x8x1xf32>
      %131 = vector.shape_cast %130 : vector<1x8x1xf32> to vector<8x1xf32>
      %132 = arith.mulf %126, %131 : vector<8x1xf32>
      %cst_80 = arith.constant dense<0.000000e+00> : vector<8xf32>
      %133 = vector.multi_reduction <add>, %129, %cst_80 [1] : vector<8x8xf32> to vector<8xf32>
      %134 = vector.shape_cast %133 : vector<8xf32> to vector<8x1xf32>
      %135 = arith.addf %132, %134 : vector<8x1xf32>
      %c1_81 = arith.constant 1 : index
      %c0_82 = arith.constant 0 : index
      %c0_83 = arith.constant 0 : index
      %136 = vector.load %arg20[%c1_81, %c0_82, %c0_83] : memref<2x8x1xf32, #tpu.memory_space<vmem>>, vector<1x8x1xf32>
      %137 = vector.shape_cast %136 : vector<1x8x1xf32> to vector<8x1xf32>
      %138 = vector.shape_cast %135 : vector<8x1xf32> to vector<1x8x1xf32>
      tpu.vector_store %arg20[%c1_81, %c0_82, %c0_83], %138 {strides = array<i32>} : memref<2x8x1xf32, #tpu.memory_space<vmem>>, vector<1x8x1xf32>,
      %c1_84 = arith.constant 1 : index
      %c0_85 = arith.constant 0 : index
      %c0_86 = arith.constant 0 : index
      %139 = vector.load %arg21[%c1_84, %c0_85, %c0_86] : memref<2x8x16xf32, #tpu.memory_space<vmem>>, vector<1x8x16xf32>
      %140 = vector.shape_cast %139 : vector<1x8x16xf32> to vector<8x16xf32>
      %141 = vector.broadcast %126 : vector<8x1xf32> to vector<8x16xf32>
      %142 = arith.mulf %141, %140 : vector<8x16xf32>
      %143 = arith.truncf %129 : vector<8x8xf32> to vector<8x8xbf16>
      %144 = vector.extract_strided_slice %58 {offsets = [0, 16], sizes = [8, 16], strides = [1, 1]} : vector<8x32xbf16> to vector<8x16xbf16>
      %cst_87 = arith.constant dense<0.000000e+00> : vector<8x16xf32>
      %145 = tpu.matmul %143, %144, %cst_87 {dimension_numbers = #tpu.dot_dimension_numbers<[1], [0], [0], [1], [0, 0, 1, 1], [], []>} : vector<8x8xbf16>, vector<8x16xbf16>, vector<8x16xf32> -> vector<8x16xf32>
      %146 = arith.addf %142, %145 : vector<8x16xf32>
      %c1_88 = arith.constant 1 : index
      %c0_89 = arith.constant 0 : index
      %c0_90 = arith.constant 0 : index
      %147 = vector.load %arg21[%c1_88, %c0_89, %c0_90] : memref<2x8x16xf32, #tpu.memory_space<vmem>>, vector<1x8x16xf32>
      %148 = vector.shape_cast %147 : vector<1x8x16xf32> to vector<8x16xf32>
      %149 = vector.shape_cast %146 : vector<8x16xf32> to vector<1x8x16xf32>
      tpu.vector_store %arg21[%c1_88, %c0_89, %c0_90], %149 {strides = array<i32>} : memref<2x8x16xf32, #tpu.memory_space<vmem>>, vector<1x8x16xf32>,
      %c1_91 = arith.constant 1 : index
      %c0_92 = arith.constant 0 : index
      %c0_93 = arith.constant 0 : index
      %150 = vector.load %arg19[%c1_91, %c0_92, %c0_93] : memref<2x8x1xf32, #tpu.memory_space<vmem>>, vector<1x8x1xf32>
      %151 = vector.shape_cast %150 : vector<1x8x1xf32> to vector<8x1xf32>
      %152 = vector.shape_cast %124 : vector<8x1xf32> to vector<1x8x1xf32>
      tpu.vector_store %arg19[%c1_91, %c0_92, %c0_93], %152 {strides = array<i32>} : memref<2x8x1xf32, #tpu.memory_space<vmem>>, vector<1x8x1xf32>,
    } else {
    }
    %7 = arith.cmpi slt, %3, %1 : i32
    %8 = arith.extui %7 : i1 to i32
    %c0_i32_0 = arith.constant 0 : i32
    %9 = arith.cmpi ne, %8, %c0_i32_0 : i32
    scf.if %9 {
      %13 = arith.index_cast %3 : i32 to index
      %c0 = arith.constant 0 : index
      %c0_3 = arith.constant 0 : index
      %14 = vector.load %arg17[%13, %c0, %c0_3] : memref<4x8x32xbf16, #tpu.memory_space<vmem>>, vector<1x8x32xbf16>
      %15 = vector.shape_cast %14 : vector<1x8x32xbf16> to vector<8x32xbf16>
      %16 = arith.index_cast %3 : i32 to index
      %c0_4 = arith.constant 0 : index
      %c0_5 = arith.constant 0 : index
      %17 = vector.load %arg18[%16, %c0_4, %c0_5] : memref<4x8x32xbf16, #tpu.memory_space<vmem>>, vector<1x8x32xbf16>
      %18 = vector.shape_cast %17 : vector<1x8x32xbf16> to vector<8x32xbf16>
      %c0_6 = arith.constant 0 : index
      %c0_7 = arith.constant 0 : index
      %19 = vector.load %arg16[%c0_6, %c0_7] : memref<8x32xbf16, #tpu.memory_space<vmem>>, vector<8x32xbf16>
      %20 = vector.extract_strided_slice %19 {offsets = [0, 0], sizes = [8, 16], strides = [1, 1]} : vector<8x32xbf16> to vector<8x16xbf16>
      %21 = vector.extract_strided_slice %15 {offsets = [0, 0], sizes = [8, 16], strides = [1, 1]} : vector<8x32xbf16> to vector<8x16xbf16>
      %cst = arith.constant dense<0.000000e+00> : vector<8x8xf32>
      %22 = tpu.matmul %20, %21, %cst {dimension_numbers = #tpu.dot_dimension_numbers<[1], [1], [0], [0], [0, 0, 1, 0], [], []>} : vector<8x16xbf16>, vector<8x16xbf16>, vector<8x8xf32> -> vector<8x8xf32>
      %c0_8 = arith.constant 0 : index
      %c0_9 = arith.constant 0 : index
      %c0_10 = arith.constant 0 : index
      %23 = vector.load %arg19[%c0_8, %c0_9, %c0_10] : memref<2x8x1xf32, #tpu.memory_space<vmem>>, vector<1x8x1xf32>
      %24 = vector.shape_cast %23 : vector<1x8x1xf32> to vector<8x1xf32>
      %cst_11 = arith.constant dense<0xFF800000> : vector<8xf32>
      %25 = vector.multi_reduction <maximumf>, %22, %cst_11 [1] : vector<8x8xf32> to vector<8xf32>
      %26 = vector.shape_cast %25 : vector<8xf32> to vector<8x1xf32>
      %27 = arith.maximumf %24, %26 : vector<8x1xf32>
      %28 = arith.subf %24, %27 : vector<8x1xf32>
      %29 = math.exp %28 : vector<8x1xf32>
      %30 = vector.broadcast %27 : vector<8x1xf32> to vector<8x8xf32>
      %31 = arith.subf %22, %30 : vector<8x8xf32>
      %32 = math.exp %31 : vector<8x8xf32>
      %c0_12 = arith.constant 0 : index
      %c0_13 = arith.constant 0 : index
      %c0_14 = arith.constant 0 : index
      %33 = vector.load %arg20[%c0_12, %c0_13, %c0_14] : memref<2x8x1xf32, #tpu.memory_space<vmem>>, vector<1x8x1xf32>
      %34 = vector.shape_cast %33 : vector<1x8x1xf32> to vector<8x1xf32>
      %35 = arith.mulf %29, %34 : vector<8x1xf32>
      %cst_15 = arith.constant dense<0.000000e+00> : vector<8xf32>
      %36 = vector.multi_reduction <add>, %32, %cst_15 [1] : vector<8x8xf32> to vector<8xf32>
      %37 = vector.shape_cast %36 : vector<8xf32> to vector<8x1xf32>
      %38 = arith.addf %35, %37 : vector<8x1xf32>
      %c0_16 = arith.constant 0 : index
      %c0_17 = arith.constant 0 : index
      %c0_18 = arith.constant 0 : index
      %39 = vector.load %arg20[%c0_16, %c0_17, %c0_18] : memref<2x8x1xf32, #tpu.memory_space<vmem>>, vector<1x8x1xf32>
      %40 = vector.shape_cast %39 : vector<1x8x1xf32> to vector<8x1xf32>
      %41 = vector.shape_cast %38 : vector<8x1xf32> to vector<1x8x1xf32>
      tpu.vector_store %arg20[%c0_16, %c0_17, %c0_18], %41 {strides = array<i32>} : memref<2x8x1xf32, #tpu.memory_space<vmem>>, vector<1x8x1xf32>,
      %c0_19 = arith.constant 0 : index
      %c0_20 = arith.constant 0 : index
      %c0_21 = arith.constant 0 : index
      %42 = vector.load %arg21[%c0_19, %c0_20, %c0_21] : memref<2x8x16xf32, #tpu.memory_space<vmem>>, vector<1x8x16xf32>
      %43 = vector.shape_cast %42 : vector<1x8x16xf32> to vector<8x16xf32>
      %44 = vector.broadcast %29 : vector<8x1xf32> to vector<8x16xf32>
      %45 = arith.mulf %44, %43 : vector<8x16xf32>
      %46 = arith.truncf %32 : vector<8x8xf32> to vector<8x8xbf16>
      %47 = vector.extract_strided_slice %18 {offsets = [0, 0], sizes = [8, 16], strides = [1, 1]} : vector<8x32xbf16> to vector<8x16xbf16>
      %cst_22 = arith.constant dense<0.000000e+00> : vector<8x16xf32>
      %48 = tpu.matmul %46, %47, %cst_22 {dimension_numbers = #tpu.dot_dimension_numbers<[1], [0], [0], [1], [0, 0, 1, 1], [], []>} : vector<8x8xbf16>, vector<8x16xbf16>, vector<8x16xf32> -> vector<8x16xf32>
      %49 = arith.addf %45, %48 : vector<8x16xf32>
      %c0_23 = arith.constant 0 : index
      %c0_24 = arith.constant 0 : index
      %c0_25 = arith.constant 0 : index
      %50 = vector.load %arg21[%c0_23, %c0_24, %c0_25] : memref<2x8x16xf32, #tpu.memory_space<vmem>>, vector<1x8x16xf32>
      %51 = vector.shape_cast %50 : vector<1x8x16xf32> to vector<8x16xf32>
      %52 = vector.shape_cast %49 : vector<8x16xf32> to vector<1x8x16xf32>
      tpu.vector_store %arg21[%c0_23, %c0_24, %c0_25], %52 {strides = array<i32>} : memref<2x8x16xf32, #tpu.memory_space<vmem>>, vector<1x8x16xf32>,
      %c0_26 = arith.constant 0 : index
      %c0_27 = arith.constant 0 : index
      %c0_28 = arith.constant 0 : index
      %53 = vector.load %arg19[%c0_26, %c0_27, %c0_28] : memref<2x8x1xf32, #tpu.memory_space<vmem>>, vector<1x8x1xf32>
      %54 = vector.shape_cast %53 : vector<1x8x1xf32> to vector<8x1xf32>
      %55 = vector.shape_cast %27 : vector<8x1xf32> to vector<1x8x1xf32>
      tpu.vector_store %arg19[%c0_26, %c0_27, %c0_28], %55 {strides = array<i32>} : memref<2x8x1xf32, #tpu.memory_space<vmem>>, vector<1x8x1xf32>,
      %56 = vector.extract_strided_slice %19 {offsets = [0, 16], sizes = [8, 16], strides = [1, 1]} : vector<8x32xbf16> to vector<8x16xbf16>
      %57 = vector.extract_strided_slice %15 {offsets = [0, 16], sizes = [8, 16], strides = [1, 1]} : vector<8x32xbf16> to vector<8x16xbf16>
      %cst_29 = arith.constant dense<0.000000e+00> : vector<8x8xf32>
      %58 = tpu.matmul %56, %57, %cst_29 {dimension_numbers = #tpu.dot_dimension_numbers<[1], [1], [0], [0], [0, 0, 1, 0], [], []>} : vector<8x16xbf16>, vector<8x16xbf16>, vector<8x8xf32> -> vector<8x8xf32>
      %c1 = arith.constant 1 : index
      %c0_30 = arith.constant 0 : index
      %c0_31 = arith.constant 0 : index
      %59 = vector.load %arg19[%c1, %c0_30, %c0_31] : memref<2x8x1xf32, #tpu.memory_space<vmem>>, vector<1x8x1xf32>
      %60 = vector.shape_cast %59 : vector<1x8x1xf32> to vector<8x1xf32>
      %cst_32 = arith.constant dense<0xFF800000> : vector<8xf32>
      %61 = vector.multi_reduction <maximumf>, %58, %cst_32 [1] : vector<8x8xf32> to vector<8xf32>
      %62 = vector.shape_cast %61 : vector<8xf32> to vector<8x1xf32>
      %63 = arith.maximumf %60, %62 : vector<8x1xf32>
      %64 = arith.subf %60, %63 : vector<8x1xf32>
      %65 = math.exp %64 : vector<8x1xf32>
      %66 = vector.broadcast %63 : vector<8x1xf32> to vector<8x8xf32>
      %67 = arith.subf %58, %66 : vector<8x8xf32>
      %68 = math.exp %67 : vector<8x8xf32>
      %c1_33 = arith.constant 1 : index
      %c0_34 = arith.constant 0 : index
      %c0_35 = arith.constant 0 : index
      %69 = vector.load %arg20[%c1_33, %c0_34, %c0_35] : memref<2x8x1xf32, #tpu.memory_space<vmem>>, vector<1x8x1xf32>
      %70 = vector.shape_cast %69 : vector<1x8x1xf32> to vector<8x1xf32>
      %71 = arith.mulf %65, %70 : vector<8x1xf32>
      %cst_36 = arith.constant dense<0.000000e+00> : vector<8xf32>
      %72 = vector.multi_reduction <add>, %68, %cst_36 [1] : vector<8x8xf32> to vector<8xf32>
      %73 = vector.shape_cast %72 : vector<8xf32> to vector<8x1xf32>
      %74 = arith.addf %71, %73 : vector<8x1xf32>
      %c1_37 = arith.constant 1 : index
      %c0_38 = arith.constant 0 : index
      %c0_39 = arith.constant 0 : index
      %75 = vector.load %arg20[%c1_37, %c0_38, %c0_39] : memref<2x8x1xf32, #tpu.memory_space<vmem>>, vector<1x8x1xf32>
      %76 = vector.shape_cast %75 : vector<1x8x1xf32> to vector<8x1xf32>
      %77 = vector.shape_cast %74 : vector<8x1xf32> to vector<1x8x1xf32>
      tpu.vector_store %arg20[%c1_37, %c0_38, %c0_39], %77 {strides = array<i32>} : memref<2x8x1xf32, #tpu.memory_space<vmem>>, vector<1x8x1xf32>,
      %c1_40 = arith.constant 1 : index
      %c0_41 = arith.constant 0 : index
      %c0_42 = arith.constant 0 : index
      %78 = vector.load %arg21[%c1_40, %c0_41, %c0_42] : memref<2x8x16xf32, #tpu.memory_space<vmem>>, vector<1x8x16xf32>
      %79 = vector.shape_cast %78 : vector<1x8x16xf32> to vector<8x16xf32>
      %80 = vector.broadcast %65 : vector<8x1xf32> to vector<8x16xf32>
      %81 = arith.mulf %80, %79 : vector<8x16xf32>
      %82 = arith.truncf %68 : vector<8x8xf32> to vector<8x8xbf16>
      %83 = vector.extract_strided_slice %18 {offsets = [0, 16], sizes = [8, 16], strides = [1, 1]} : vector<8x32xbf16> to vector<8x16xbf16>
      %cst_43 = arith.constant dense<0.000000e+00> : vector<8x16xf32>
      %84 = tpu.matmul %82, %83, %cst_43 {dimension_numbers = #tpu.dot_dimension_numbers<[1], [0], [0], [1], [0, 0, 1, 1], [], []>} : vector<8x8xbf16>, vector<8x16xbf16>, vector<8x16xf32> -> vector<8x16xf32>
      %85 = arith.addf %81, %84 : vector<8x16xf32>
      %c1_44 = arith.constant 1 : index
      %c0_45 = arith.constant 0 : index
      %c0_46 = arith.constant 0 : index
      %86 = vector.load %arg21[%c1_44, %c0_45, %c0_46] : memref<2x8x16xf32, #tpu.memory_space<vmem>>, vector<1x8x16xf32>
      %87 = vector.shape_cast %86 : vector<1x8x16xf32> to vector<8x16xf32>
      %88 = vector.shape_cast %85 : vector<8x16xf32> to vector<1x8x16xf32>
      tpu.vector_store %arg21[%c1_44, %c0_45, %c0_46], %88 {strides = array<i32>} : memref<2x8x16xf32, #tpu.memory_space<vmem>>, vector<1x8x16xf32>,
      %c1_47 = arith.constant 1 : index
      %c0_48 = arith.constant 0 : index
      %c0_49 = arith.constant 0 : index
      %89 = vector.load %arg19[%c1_47, %c0_48, %c0_49] : memref<2x8x1xf32, #tpu.memory_space<vmem>>, vector<1x8x1xf32>
      %90 = vector.shape_cast %89 : vector<1x8x1xf32> to vector<8x1xf32>
      %91 = vector.shape_cast %63 : vector<8x1xf32> to vector<1x8x1xf32>
      tpu.vector_store %arg19[%c1_47, %c0_48, %c0_49], %91 {strides = array<i32>} : memref<2x8x1xf32, #tpu.memory_space<vmem>>, vector<1x8x1xf32>,
    } else {
    }
    %c0_i32_1 = arith.constant 0 : i32
    %10 = arith.cmpi eq, %3, %c0_i32_1 : i32
    %11 = arith.extui %10 : i1 to i32
    %c0_i32_2 = arith.constant 0 : i32
    %12 = arith.cmpi ne, %11, %c0_i32_2 : i32
    scf.if %12 {
      %c0 = arith.constant 0 : index
      %c0_3 = arith.constant 0 : index
      %c0_4 = arith.constant 0 : index
      %13 = vector.load %arg20[%c0, %c0_3, %c0_4] : memref<2x8x1xf32, #tpu.memory_space<vmem>>, vector<1x8x1xf32>
      %14 = vector.shape_cast %13 : vector<1x8x1xf32> to vector<8x1xf32>
      %15 = tpu.reciprocal %14 : vector<8x1xf32> -> vector<8x1xf32>
      %c0_5 = arith.constant 0 : index
      %c0_6 = arith.constant 0 : index
      %c0_7 = arith.constant 0 : index
      %16 = vector.load %arg21[%c0_5, %c0_6, %c0_7] : memref<2x8x16xf32, #tpu.memory_space<vmem>>, vector<1x8x16xf32>
      %17 = vector.shape_cast %16 : vector<1x8x16xf32> to vector<8x16xf32>
      %18 = vector.broadcast %15 : vector<8x1xf32> to vector<8x16xf32>
      %19 = arith.mulf %17, %18 : vector<8x16xf32>
      %20 = arith.truncf %19 : vector<8x16xf32> to vector<8x16xbf16>
      %c1 = arith.constant 1 : index
      %c0_8 = arith.constant 0 : index
      %c0_9 = arith.constant 0 : index
      %21 = vector.load %arg20[%c1, %c0_8, %c0_9] : memref<2x8x1xf32, #tpu.memory_space<vmem>>, vector<1x8x1xf32>
      %22 = vector.shape_cast %21 : vector<1x8x1xf32> to vector<8x1xf32>
      %23 = tpu.reciprocal %22 : vector<8x1xf32> -> vector<8x1xf32>
      %c1_10 = arith.constant 1 : index
      %c0_11 = arith.constant 0 : index
      %c0_12 = arith.constant 0 : index
      %24 = vector.load %arg21[%c1_10, %c0_11, %c0_12] : memref<2x8x16xf32, #tpu.memory_space<vmem>>, vector<1x8x16xf32>
      %25 = vector.shape_cast %24 : vector<1x8x16xf32> to vector<8x16xf32>
      %26 = vector.broadcast %23 : vector<8x1xf32> to vector<8x16xf32>
      %27 = arith.mulf %25, %26 : vector<8x16xf32>
      %28 = arith.truncf %27 : vector<8x16xf32> to vector<8x16xbf16>
      %29 = tpu.concatenate %20, %28 in 1 : vector<8x16xbf16>, vector<8x16xbf16> -> vector<8x32xbf16>
      %c0_13 = arith.constant 0 : index
      %c0_14 = arith.constant 0 : index
      %30 = vector.load %arg13[%c0_13, %c0_14] : memref<32x32xbf16, #tpu.memory_space<vmem>>, vector<32x32xbf16>
      %cst = arith.constant dense<0.000000e+00> : vector<8x32xf32>
      %31 = tpu.matmul %29, %30, %cst {dimension_numbers = #tpu.dot_dimension_numbers<[1], [0], [0], [1], [0, 0, 1, 1], [], []>} : vector<8x32xbf16>, vector<32x32xbf16>, vector<8x32xf32> -> vector<8x32xf32>
      %c0_15 = arith.constant 0 : index
      %c0_16 = arith.constant 0 : index
      %32 = vector.load %arg14[%c0_15, %c0_16] : memref<1x32xf32, #tpu.memory_space<vmem>>, vector<1x32xf32>
      %33 = vector.broadcast %32 : vector<1x32xf32> to vector<8x32xf32>
      %34 = arith.addf %31, %33 : vector<8x32xf32>
      %c0_17 = arith.constant 0 : index
      %c0_18 = arith.constant 0 : index
      %c0_19 = arith.constant 0 : index
      %35 = vector.load %arg15[%c0_17, %c0_18, %c0_19] : memref<1x8x32xf32, #tpu.memory_space<vmem>>, vector<1x8x32xf32>
      %36 = vector.shape_cast %35 : vector<1x8x32xf32> to vector<8x32xf32>
      %37 = vector.shape_cast %34 : vector<8x32xf32> to vector<1x8x32xf32>
      tpu.vector_store %arg15[%c0_17, %c0_18, %c0_19], %37 {strides = array<i32>} : memref<1x8x32xf32, #tpu.memory_space<vmem>>, vector<1x8x32xf32>,
    } else {
    }
    return
  }
  func.func @transform_0(%arg0: i32, %arg1: i32, %arg2: memref<10xi32, #tpu.memory_space<smem>>, %arg3: memref<10xi32, #tpu.memory_space<smem>>) -> (i32, i32, i32) {
    %0 = arith.index_cast %arg1 : i32 to index
    %1 = memref.load %arg2[%0] : memref<10xi32, #tpu.memory_space<smem>>
    %c0_i32 = arith.constant 0 : i32
    %c0_i32_0 = arith.constant 0 : i32
    return %arg0, %1, %c0_i32 : i32, i32, i32
  }
  func.func @transform_1(%arg0: i32, %arg1: i32, %arg2: memref<10xi32, #tpu.memory_space<smem>>, %arg3: memref<10xi32, #tpu.memory_space<smem>>) -> (i32, i32) {
    %c0_i32 = arith.constant 0 : i32
    %c0_i32_0 = arith.constant 0 : i32
    %c0_i32_1 = arith.constant 0 : i32
    return %c0_i32, %c0_i32_0 : i32, i32
  }
  func.func @transform_2(%arg0: i32, %arg1: i32, %arg2: memref<10xi32, #tpu.memory_space<smem>>, %arg3: memref<10xi32, #tpu.memory_space<smem>>) -> (i32, i32) {
    %c0_i32 = arith.constant 0 : i32
    %c0_i32_0 = arith.constant 0 : i32
    %c0_i32_1 = arith.constant 0 : i32
    return %c0_i32, %c0_i32_0 : i32, i32
  }
  func.func @transform_3(%arg0: i32, %arg1: i32, %arg2: memref<10xi32, #tpu.memory_space<smem>>, %arg3: memref<10xi32, #tpu.memory_space<smem>>) -> (i32, i32) {
    %c0_i32 = arith.constant 0 : i32
    %c0_i32_0 = arith.constant 0 : i32
    %c0_i32_1 = arith.constant 0 : i32
    return %c0_i32, %c0_i32_0 : i32, i32
  }
  func.func @transform_4(%arg0: i32, %arg1: i32, %arg2: memref<10xi32, #tpu.memory_space<smem>>, %arg3: memref<10xi32, #tpu.memory_space<smem>>) -> (i32, i32) {
    %c0_i32 = arith.constant 0 : i32
    %c0_i32_0 = arith.constant 0 : i32
    %c0_i32_1 = arith.constant 0 : i32
    return %c0_i32, %c0_i32_0 : i32, i32
  }
  func.func @transform_5(%arg0: i32, %arg1: i32, %arg2: memref<10xi32, #tpu.memory_space<smem>>, %arg3: memref<10xi32, #tpu.memory_space<smem>>) -> (i32, i32) {
    %c0_i32 = arith.constant 0 : i32
    %c0_i32_0 = arith.constant 0 : i32
    %c0_i32_1 = arith.constant 0 : i32
    return %c0_i32, %c0_i32_0 : i32, i32
  }
  func.func @transform_6(%arg0: i32, %arg1: i32, %arg2: memref<10xi32, #tpu.memory_space<smem>>, %arg3: memref<10xi32, #tpu.memory_space<smem>>) -> (i32, i32) {
    %c0_i32 = arith.constant 0 : i32
    %c0_i32_0 = arith.constant 0 : i32
    %c0_i32_1 = arith.constant 0 : i32
    return %c0_i32, %c0_i32_0 : i32, i32
  }
  func.func @transform_7(%arg0: i32, %arg1: i32, %arg2: memref<10xi32, #tpu.memory_space<smem>>, %arg3: memref<10xi32, #tpu.memory_space<smem>>) -> (i32, i32) {
    %c0_i32 = arith.constant 0 : i32
    %c0_i32_0 = arith.constant 0 : i32
    %c0_i32_1 = arith.constant 0 : i32
    return %c0_i32, %c0_i32_0 : i32, i32
  }
  func.func @transform_8(%arg0: i32, %arg1: i32, %arg2: memref<10xi32, #tpu.memory_space<smem>>, %arg3: memref<10xi32, #tpu.memory_space<smem>>) -> (i32, i32) {
    %c0_i32 = arith.constant 0 : i32
    %c0_i32_0 = arith.constant 0 : i32
    %c0_i32_1 = arith.constant 0 : i32
    return %c0_i32, %c0_i32_0 : i32, i32
  }
  func.func @transform_9(%arg0: i32, %arg1: i32, %arg2: memref<10xi32, #tpu.memory_space<smem>>, %arg3: memref<10xi32, #tpu.memory_space<smem>>) -> (i32, i32) {
    %c0_i32 = arith.constant 0 : i32
    %c0_i32_0 = arith.constant 0 : i32
    %c0_i32_1 = arith.constant 0 : i32
    return %c0_i32, %c0_i32_0 : i32, i32
  }
  func.func @transform_10(%arg0: i32, %arg1: i32, %arg2: memref<10xi32, #tpu.memory_space<smem>>, %arg3: memref<10xi32, #tpu.memory_space<smem>>) -> (i32, i32) {
    %c0_i32 = arith.constant 0 : i32
    %c0_i32_0 = arith.constant 0 : i32
    %c0_i32_1 = arith.constant 0 : i32
    return %c0_i32, %c0_i32_0 : i32, i32
  }
  func.func @transform_11(%arg0: i32, %arg1: i32, %arg2: memref<10xi32, #tpu.memory_space<smem>>, %arg3: memref<10xi32, #tpu.memory_space<smem>>) -> (i32, i32, i32) {
    %0 = arith.index_cast %arg1 : i32 to index
    %1 = memref.load %arg2[%0] : memref<10xi32, #tpu.memory_space<smem>>
    %c0_i32 = arith.constant 0 : i32
    %c0_i32_0 = arith.constant 0 : i32
    return %arg0, %1, %c0_i32 : i32, i32, i32
  }
}

</mosaic_0001>

<llo_original>
// kernel: tpu_custom_call.1
$region0: #{tpu_custom_call.1}
  #allocation0 [shape = 'u32[]', space=smem, size = 0x4, offset = 0x4, fixed_abs, tag = 'smem constant byte address 0x4 - core index']
  #allocation1 [shape = 'u32[144,128]{1,0:T(1,128)}', space=vmem, size = 0x12000, scoped, tag = 'internal scratch']
  #allocation2 [shape = 'bf16[8,32]{1,0:T(8,128)(2,1)}', space=vmem, size = 0x800, scoped, tag = 'scratch operand']
  #allocation3 [shape = 'bf16[4,8,32]{2,1,0:T(8,128)(2,1)}', space=vmem, size = 0x2000, scoped, tag = 'scratch operand']
  #allocation4 [shape = 'bf16[4,8,32]{2,1,0:T(8,128)(2,1)}', space=vmem, size = 0x2000, scoped, tag = 'scratch operand']
  #allocation5 [shape = 'f32[2,8,1]{2,1,0:T(8,128)}', space=vmem, size = 0x2000, scoped, tag = 'scratch operand']
  #allocation6 [shape = 'f32[2,8,1]{2,1,0:T(8,128)}', space=vmem, size = 0x2000, scoped, tag = 'scratch operand']
  #allocation7 [shape = 'f32[2,8,16]{2,1,0:T(8,128)}', space=vmem, size = 0x2000, scoped, tag = 'scratch operand']
  #allocation8 [shape = 's32[1]{0}', space=sflag, size = 0x4, scoped, tag = 'scoped memory for tpu_custom_call.1']
  #allocation9 [shape = 'u8[512]{0}', space=smem, size = 0x200, scoped, tag = 'prefetched SMEM operand 0']
  #allocation10 [shape = 'u8[512]{0}', space=smem, size = 0x200, scoped, tag = 'prefetched SMEM operand 1']
  %s0 = inlined_call_operand.hbm [shape: s32[10], index: 0, kind: input, shape index: {}]
  %s1 = inlined_call_operand.vmem [shape: s32[10], index: 1, kind: input, shape index: {}]
  %s2 = inlined_call_operand.hbm [shape: f32[2,32,32], index: 2, kind: input, shape index: {}]
  %s3 = inlined_call_operand.vmem [shape: f32[1,32], index: 3, kind: input, shape index: {}]
  %s4 = inlined_call_operand.hbm [shape: f32[1,32], index: 4, kind: input, shape index: {}]
  %s5 = inlined_call_operand.vmem [shape: bf16[32,32], index: 5, kind: input, shape index: {}]
  %s6 = inlined_call_operand.hbm [shape: bf16[32,32], index: 6, kind: input, shape index: {}]
  %s7 = inlined_call_operand.hbm [shape: bf16[32,32], index: 7, kind: input, shape index: {}]
  %s8 = inlined_call_operand.hbm [shape: f32[1,32], index: 8, kind: input, shape index: {}]
  %s9 = inlined_call_operand.hbm [shape: f32[1,32], index: 9, kind: input, shape index: {}]
  %s10 = inlined_call_operand.vmem [shape: f32[1,32], index: 10, kind: input, shape index: {}]
  %s11 = inlined_call_operand.vmem [shape: bf16[32,32], index: 11, kind: input, shape index: {}]
  %s12 = inlined_call_operand.vmem [shape: f32[1,32], index: 12, kind: input, shape index: {}]
  %s13 = inlined_call_operand.hbm [shape: f32[2,32,32], index: 13, kind: output, shape index: {}]
  %s14 = sld [smem:[#allocation0]]
  $region113: #{tpu_custom_call.1} parent=0
    _
  %s16 = ssub.s32 1, %s14
  %s17 = scalar_select 0, %s16, %s14
  %19 = dma.hbm_to_smem %s0, 16, [#allocation9], [#allocation8]
  %s20 = sshll.u32 %s1, 4
  %s21 = int_to_ptr.vmem [resolvable:$true] %s20
  %23 = dma.vmem_to_smem %s21, 16, [#allocation10], [#allocation8]
  %24 = dma.done [#allocation8], 32
  %25 = sfence
  $region1: #{tpu_custom_call.1} parent=0
    #allocation11 [shape = 'u8[8192]{0}', space=vmem, size = 0x2000, scoped, tag = 'input window, operand 2']
    #allocation12 [shape = 's32[2]{0}', space=sflag, size = 0x8, scoped, tag = 'scoped memory for tpu_custom_call.1']
    #allocation13 [shape = 's32[2]{0}', space=sflag, size = 0x8, scoped, tag = 'scoped memory for tpu_custom_call.1']
    #allocation14 [shape = 'u8[512]{0}', space=vmem, size = 0x400, scoped, tag = 'input window, operand 4, single buffered']
    #allocation15 [shape = 's32[1]{0}', space=sflag, size = 0x4, scoped, tag = 'scoped memory for tpu_custom_call.1']
    #allocation16 [shape = 'u8[8192]{0}', space=vmem, size = 0x2000, scoped, tag = 'input window, operand 6, single buffered']
    #allocation17 [shape = 'u8[8192]{0}', space=vmem, size = 0x2000, scoped, tag = 'input window, operand 7, single buffered']
    #allocation18 [shape = 's32[1]{0}', space=sflag, size = 0x4, scoped, tag = 'scoped memory for tpu_custom_call.1']
    #allocation19 [shape = 'u8[512]{0}', space=vmem, size = 0x400, scoped, tag = 'input window, operand 8, single buffered']
    #allocation20 [shape = 'u8[512]{0}', space=vmem, size = 0x400, scoped, tag = 'input window, operand 9, single buffered']
    #allocation21 [shape = 's32[1]{0}', space=sflag, size = 0x4, scoped, tag = 'scoped memory for tpu_custom_call.1']
    #allocation22 [shape = 'u8[8192]{0}', space=vmem, size = 0x2000, scoped, tag = 'output window, operand 0']
    %26 = vsyncpa [#allocation12], 0
    %s27 = scalar_lea.sflag [#allocation12], 1
    %28 = vsyncpa %s27, 0
    %29 = vsyncpa [#allocation15], 0
    %30 = vsyncpa [#allocation18], 0
    %31 = vsyncpa [#allocation21], 0
    %32 = vsyncpa [#allocation13], 0
    %s33 = scalar_lea.sflag [#allocation13], 1
    %34 = vsyncpa %s33, 0
    loop: start=0, step=1, limit=22
    $region2: #{tpu_custom_call.1} parent=1 // loop_pre_header
      _
    $region3: #{tpu_custom_call.1} parent=1 // loop_header
      %s36 = sphi 0, %s40
      %p37 = scmp.ge.s32.totalorder %s36, 22
      %s43 = sphi 0, %s55
      %s44 = sphi 0, %s51
      %s45 = sphi 0, %s43
      %s46 = sphi 0, %s44
      %s47 = sphi 0, %s45
      %s48 = sphi 0, %s46
      %s62 = sphi 0, %s64
      %s65 = sphi 0, %s62
      %s66 = sphi 0, %s65
      %s82 = sphi 0, %s66
      %s86 = sphi 0, %s86
      %s88 = sphi 0, %s86
      %s89 = sphi 0, %s88
      %s103 = sphi 0, %s89
      %s107 = sphi 0, %s107
      %s109 = sphi 0, %s107
      %s110 = sphi 0, %s109
      %s124 = sphi 0, %s110
      %s128 = sphi 0, %s128
      %s130 = sphi 0, %s128
      %s131 = sphi 0, %s130
      %s145 = sphi 0, %s131
      %s149 = sphi 0, %s149
      %s151 = sphi 0, %s149
      %s152 = sphi 0, %s151
      %s166 = sphi 0, %s152
      %s170 = sphi 0, %s170
      %s172 = sphi 0, %s170
      %s173 = sphi 0, %s172
      %s187 = sphi 0, %s173
      %s191 = sphi 0, %s191
      %s193 = sphi 0, %s191
      %s194 = sphi 0, %s193
      %s208 = sphi 0, %s194
      %s212 = sphi 0, %s212
      %s214 = sphi 0, %s212
      %s215 = sphi 0, %s214
      %s229 = sphi 0, %s215
      %s233 = sphi 0, %s233
      %s235 = sphi 0, %s233
      %s236 = sphi 0, %s235
      %s250 = sphi 0, %s236
      %s254 = sphi 0, %s254
      %s256 = sphi 0, %s254
      %s257 = sphi 0, %s256
      %s271 = sphi 0, %s257
      %s275 = sphi 0, %s275
      %s277 = sphi 0, %s275
      %s278 = sphi 0, %s277
      %s292 = sphi 0, %s278
      %s302 = sphi 0, %s304
      %s305 = sphi 0, %s302
      %s306 = sphi 0, %s305
      %s322 = sphi 0, %s306
    $region4: #{tpu_custom_call.1} parent=1 // loop_header_branch
      %39 = sbr.rel (%p37) target = $region8
    $region5: #{tpu_custom_call.1} parent=1 // loop_body
      %s41 = ssub.s32 %s36, 1
      %s42 = ssub.s32 %s36, 2
      %s49 = sadd.s32 1, %s44
      %p50 = scmp.ge.s32.totalorder %s49, 10
      %s51 = scalar_select %p50, 0, %s49
      %s52 = sadd.s32 1, %s43
      %s53 = scalar_select %p50, %s52, %s43
      %p54 = scmp.ge.s32.totalorder %s53, 2
      %s55 = scalar_select %p54, 0, %s53
      %s56 = sld [smem:[#allocation9 + %s44]]
      %s57 = sld [smem:[#allocation9 + %s51]]
      %s58 = ssub.s32 %s43, %s55
      %s59 = ssub.s32 %s56, %s57
      %s60 = sor.u32 %s58, %s59
      %p61 = scmp.eq.s32.totalorder %s60, 0
      %s63 = sadd.s32 %s62, 1
      %s64 = scalar_select %p61, %s62, %s63
      %p67 = pneg %p61
      %p68 = scmp.eq.s32.totalorder %s36, 19
      %p69 = por %p67, %p68
      %p70 = scmp.ne.s32.totalorder %s62, %s65
      %p71 = scmp.eq.s32.totalorder %s36, 0
      %p72 = por %p70, %p71
      %p73 = scmp.ne.s32.totalorder %s62, %s65
      %p74 = scmp.eq.s32.totalorder %s41, 19
      %p75 = por %p73, %p74
      %p76 = scmp.ne.s32.totalorder %s65, %s66
      %p77 = scmp.eq.s32.totalorder %s41, 0
      %p78 = por %p76, %p77
      %p79 = scmp.ne.s32.totalorder %s65, %s66
      %p80 = scmp.eq.s32.totalorder %s42, 19
      %p81 = por %p79, %p80
      %p83 = scmp.ne.s32.totalorder %s66, %s82
      %p84 = scmp.eq.s32.totalorder %s42, 0
      %p85 = por %p83, %p84
      %s87 = sadd.s32 %s86, 1
      %p90 = scmp.eq.s32.totalorder %s36, 19
      %p91 = scmp.ne.s32.totalorder %s86, %s88
      %p92 = scmp.eq.s32.totalorder %s36, 0
      %p93 = por %p91, %p92
      %p94 = scmp.ne.s32.totalorder %s86, %s88
      %p95 = scmp.eq.s32.totalorder %s41, 19
      %p96 = por %p94, %p95
      %p97 = scmp.ne.s32.totalorder %s88, %s89
      %p98 = scmp.eq.s32.totalorder %s41, 0
      %p99 = por %p97, %p98
      %p100 = scmp.ne.s32.totalorder %s88, %s89
      %p101 = scmp.eq.s32.totalorder %s42, 19
      %p102 = por %p100, %p101
      %p104 = scmp.ne.s32.totalorder %s89, %s103
      %p105 = scmp.eq.s32.totalorder %s42, 0
      %p106 = por %p104, %p105
      %s108 = sadd.s32 %s107, 1
      %p111 = scmp.eq.s32.totalorder %s36, 19
      %p112 = scmp.ne.s32.totalorder %s107, %s109
      %p113 = scmp.eq.s32.totalorder %s36, 0
      %p114 = por %p112, %p113
      %p115 = scmp.ne.s32.totalorder %s107, %s109
      %p116 = scmp.eq.s32.totalorder %s41, 19
      %p117 = por %p115, %p116
      %p118 = scmp.ne.s32.totalorder %s109, %s110
      %p119 = scmp.eq.s32.totalorder %s41, 0
      %p120 = por %p118, %p119
      %p121 = scmp.ne.s32.totalorder %s109, %s110
      %p122 = scmp.eq.s32.totalorder %s42, 19
      %p123 = por %p121, %p122
      %p125 = scmp.ne.s32.totalorder %s110, %s124
      %p126 = scmp.eq.s32.totalorder %s42, 0
      %p127 = por %p125, %p126
      %s129 = sadd.s32 %s128, 1
      %p132 = scmp.eq.s32.totalorder %s36, 19
      %p133 = scmp.ne.s32.totalorder %s128, %s130
      %p134 = scmp.eq.s32.totalorder %s36, 0
      %p135 = por %p133, %p134
      %p136 = scmp.ne.s32.totalorder %s128, %s130
      %p137 = scmp.eq.s32.totalorder %s41, 19
      %p138 = por %p136, %p137
      %p139 = scmp.ne.s32.totalorder %s130, %s131
      %p140 = scmp.eq.s32.totalorder %s41, 0
      %p141 = por %p139, %p140
      %p142 = scmp.ne.s32.totalorder %s130, %s131
      %p143 = scmp.eq.s32.totalorder %s42, 19
      %p144 = por %p142, %p143
      %p146 = scmp.ne.s32.totalorder %s131, %s145
      %p147 = scmp.eq.s32.totalorder %s42, 0
      %p148 = por %p146, %p147
      %s150 = sadd.s32 %s149, 1
      %p153 = scmp.eq.s32.totalorder %s36, 19
      %p154 = scmp.ne.s32.totalorder %s149, %s151
      %p155 = scmp.eq.s32.totalorder %s36, 0
      %p156 = por %p154, %p155
      %p157 = scmp.ne.s32.totalorder %s149, %s151
      %p158 = scmp.eq.s32.totalorder %s41, 19
      %p159 = por %p157, %p158
      %p160 = scmp.ne.s32.totalorder %s151, %s152
      %p161 = scmp.eq.s32.totalorder %s41, 0
      %p162 = por %p160, %p161
      %p163 = scmp.ne.s32.totalorder %s151, %s152
      %p164 = scmp.eq.s32.totalorder %s42, 19
      %p165 = por %p163, %p164
      %p167 = scmp.ne.s32.totalorder %s152, %s166
      %p168 = scmp.eq.s32.totalorder %s42, 0
      %p169 = por %p167, %p168
      %s171 = sadd.s32 %s170, 1
      %p174 = scmp.eq.s32.totalorder %s36, 19
      %p175 = scmp.ne.s32.totalorder %s170, %s172
      %p176 = scmp.eq.s32.totalorder %s36, 0
      %p177 = por %p175, %p176
      %p178 = scmp.ne.s32.totalorder %s170, %s172
      %p179 = scmp.eq.s32.totalorder %s41, 19
      %p180 = por %p178, %p179
      %p181 = scmp.ne.s32.totalorder %s172, %s173
      %p182 = scmp.eq.s32.totalorder %s41, 0
      %p183 = por %p181, %p182
      %p184 = scmp.ne.s32.totalorder %s172, %s173
      %p185 = scmp.eq.s32.totalorder %s42, 19
      %p186 = por %p184, %p185
      %p188 = scmp.ne.s32.totalorder %s173, %s187
      %p189 = scmp.eq.s32.totalorder %s42, 0
      %p190 = por %p188, %p189
      %s192 = sadd.s32 %s191, 1
      %p195 = scmp.eq.s32.totalorder %s36, 19
      %p196 = scmp.ne.s32.totalorder %s191, %s193
      %p197 = scmp.eq.s32.totalorder %s36, 0
      %p198 = por %p196, %p197
      %p199 = scmp.ne.s32.totalorder %s191, %s193
      %p200 = scmp.eq.s32.totalorder %s41, 19
      %p201 = por %p199, %p200
      %p202 = scmp.ne.s32.totalorder %s193, %s194
      %p203 = scmp.eq.s32.totalorder %s41, 0
      %p204 = por %p202, %p203
      %p205 = scmp.ne.s32.totalorder %s193, %s194
      %p206 = scmp.eq.s32.totalorder %s42, 19
      %p207 = por %p205, %p206
      %p209 = scmp.ne.s32.totalorder %s194, %s208
      %p210 = scmp.eq.s32.totalorder %s42, 0
      %p211 = por %p209, %p210
      %s213 = sadd.s32 %s212, 1
      %p216 = scmp.eq.s32.totalorder %s36, 19
      %p217 = scmp.ne.s32.totalorder %s212, %s214
      %p218 = scmp.eq.s32.totalorder %s36, 0
      %p219 = por %p217, %p218
      %p220 = scmp.ne.s32.totalorder %s212, %s214
      %p221 = scmp.eq.s32.totalorder %s41, 19
      %p222 = por %p220, %p221
      %p223 = scmp.ne.s32.totalorder %s214, %s215
      %p224 = scmp.eq.s32.totalorder %s41, 0
      %p225 = por %p223, %p224
      %p226 = scmp.ne.s32.totalorder %s214, %s215
      %p227 = scmp.eq.s32.totalorder %s42, 19
      %p228 = por %p226, %p227
      %p230 = scmp.ne.s32.totalorder %s215, %s229
      %p231 = scmp.eq.s32.totalorder %s42, 0
      %p232 = por %p230, %p231
      %s234 = sadd.s32 %s233, 1
      %p237 = scmp.eq.s32.totalorder %s36, 19
      %p238 = scmp.ne.s32.totalorder %s233, %s235
      %p239 = scmp.eq.s32.totalorder %s36, 0
      %p240 = por %p238, %p239
      %p241 = scmp.ne.s32.totalorder %s233, %s235
      %p242 = scmp.eq.s32.totalorder %s41, 19
      %p243 = por %p241, %p242
      %p244 = scmp.ne.s32.totalorder %s235, %s236
      %p245 = scmp.eq.s32.totalorder %s41, 0
      %p246 = por %p244, %p245
      %p247 = scmp.ne.s32.totalorder %s235, %s236
      %p248 = scmp.eq.s32.totalorder %s42, 19
      %p249 = por %p247, %p248
      %p251 = scmp.ne.s32.totalorder %s236, %s250
      %p252 = scmp.eq.s32.totalorder %s42, 0
      %p253 = por %p251, %p252
      %s255 = sadd.s32 %s254, 1
      %p258 = scmp.eq.s32.totalorder %s36, 19
      %p259 = scmp.ne.s32.totalorder %s254, %s256
      %p260 = scmp.eq.s32.totalorder %s36, 0
      %p261 = por %p259, %p260
      %p262 = scmp.ne.s32.totalorder %s254, %s256
      %p263 = scmp.eq.s32.totalorder %s41, 19
      %p264 = por %p262, %p263
      %p265 = scmp.ne.s32.totalorder %s256, %s257
      %p266 = scmp.eq.s32.totalorder %s41, 0
      %p267 = por %p265, %p266
      %p268 = scmp.ne.s32.totalorder %s256, %s257
      %p269 = scmp.eq.s32.totalorder %s42, 19
      %p270 = por %p268, %p269
      %p272 = scmp.ne.s32.totalorder %s257, %s271
      %p273 = scmp.eq.s32.totalorder %s42, 0
      %p274 = por %p272, %p273
      %s276 = sadd.s32 %s275, 1
      %p279 = scmp.eq.s32.totalorder %s36, 19
      %p280 = scmp.ne.s32.totalorder %s275, %s277
      %p281 = scmp.eq.s32.totalorder %s36, 0
      %p282 = por %p280, %p281
      %p283 = scmp.ne.s32.totalorder %s275, %s277
      %p284 = scmp.eq.s32.totalorder %s41, 19
      %p285 = por %p283, %p284
      %p286 = scmp.ne.s32.totalorder %s277, %s278
      %p287 = scmp.eq.s32.totalorder %s41, 0
      %p288 = por %p286, %p287
      %p289 = scmp.ne.s32.totalorder %s277, %s278
      %p290 = scmp.eq.s32.totalorder %s42, 19
      %p291 = por %p289, %p290
      %p293 = scmp.ne.s32.totalorder %s278, %s292
      %p294 = scmp.eq.s32.totalorder %s42, 0
      %p295 = por %p293, %p294
      %s296 = sld [smem:[#allocation9 + %s44]]
      %s297 = sld [smem:[#allocation9 + %s51]]
      %s298 = ssub.s32 %s43, %s55
      %s299 = ssub.s32 %s296, %s297
      %s300 = sor.u32 %s298, %s299
      %p301 = scmp.eq.s32.totalorder %s300, 0
      %s303 = sadd.s32 %s302, 1
      %s304 = scalar_select %p301, %s302, %s303
      %p307 = pneg %p301
      %p308 = scmp.eq.s32.totalorder %s36, 19
      %p309 = por %p307, %p308
      %p310 = scmp.ne.s32.totalorder %s302, %s305
      %p311 = scmp.eq.s32.totalorder %s36, 0
      %p312 = por %p310, %p311
      %p313 = scmp.ne.s32.totalorder %s302, %s305
      %p314 = scmp.eq.s32.totalorder %s41, 19
      %p315 = por %p313, %p314
      %p316 = scmp.ne.s32.totalorder %s305, %s306
      %p317 = scmp.eq.s32.totalorder %s41, 0
      %p318 = por %p316, %p317
      %p319 = scmp.ne.s32.totalorder %s305, %s306
      %p320 = scmp.eq.s32.totalorder %s42, 19
      %p321 = por %p319, %p320
      %p323 = scmp.ne.s32.totalorder %s306, %s322
      %p324 = scmp.eq.s32.totalorder %s42, 0
      %p325 = por %p323, %p324
      %p326 = scmp.le.s32.totalorder 1, %s36
      %p327 = scmp.lt.s32.totalorder %s36, 21
      %p328 = pnand %p326, %p327
      %p329 = pneg %p328
      // Predicated region
      $region9: #{tpu_custom_call.1} parent=5 // pred_check
        _
      $region10: #{tpu_custom_call.1} parent=5 // pred_check_branch
        %331 = sbr.rel (%p328) target = $region12
      $region11: #{tpu_custom_call.1} parent=5 // pred_region
        %s332 = ssub.s32 %s36, 1
        // Predicated region
        $region13: #{tpu_custom_call.1} parent=11 // pred_check
          %p333 = pneg %p99
        $region14: #{tpu_custom_call.1} parent=11 // pred_check_branch
          %335 = sbr.rel (%p333) target = $region16
        $region15: #{tpu_custom_call.1} parent=11 // pred_region
          _
        $region16: #{tpu_custom_call.1} parent=11 // pred_fallthru
          _
        // Predicated region
        $region17: #{tpu_custom_call.1} parent=11 // pred_check
          %p336 = pneg %p120
        $region18: #{tpu_custom_call.1} parent=11 // pred_check_branch
          %338 = sbr.rel (%p336) target = $region20
        $region19: #{tpu_custom_call.1} parent=11 // pred_region
          %s340 = ssub.s32 16, 16
          %341 = vsyncadd [#allocation15], %s340
          %s343 = sshll.u32 [#allocation14], 4
          %s344 = int_to_ptr.vmem [resolvable:$true] %s343
          %346 = dma.hbm_to_vmem [thread:$0]  %s4, 16, %s344, [#allocation15]
        $region20: #{tpu_custom_call.1} parent=11 // pred_fallthru
          _
        // Predicated region
        $region21: #{tpu_custom_call.1} parent=11 // pred_check
          %p347 = pneg %p141
        $region22: #{tpu_custom_call.1} parent=11 // pred_check_branch
          %349 = sbr.rel (%p347) target = $region24
        $region23: #{tpu_custom_call.1} parent=11 // pred_region
          _
        $region24: #{tpu_custom_call.1} parent=11 // pred_fallthru
          _
        // Predicated region
        $region25: #{tpu_custom_call.1} parent=11 // pred_check
          %p350 = pneg %p162
        $region26: #{tpu_custom_call.1} parent=11 // pred_check_branch
          %352 = sbr.rel (%p350) target = $region28
        $region27: #{tpu_custom_call.1} parent=11 // pred_region
          %s354 = ssub.s32 256, 256
          %355 = vsyncadd [#allocation15], %s354
          %s356 = sshll.u32 [#allocation16], 4
          %s357 = int_to_ptr.vmem [resolvable:$true] %s356
          %362 = dma.hbm_to_vmem [thread:$0]  %s6, 256, %s357, [#allocation15], 64, 64, 4
        $region28: #{tpu_custom_call.1} parent=11 // pred_fallthru
          _
        // Predicated region
        $region29: #{tpu_custom_call.1} parent=11 // pred_check
          %p363 = pneg %p183
        $region30: #{tpu_custom_call.1} parent=11 // pred_check_branch
          %365 = sbr.rel (%p363) target = $region32
        $region31: #{tpu_custom_call.1} parent=11 // pred_region
          %s367 = ssub.s32 256, 256
          %368 = vsyncadd [#allocation18], %s367
          %s369 = sshll.u32 [#allocation17], 4
          %s370 = int_to_ptr.vmem [resolvable:$true] %s369
          %375 = dma.hbm_to_vmem [thread:$0]  %s7, 256, %s370, [#allocation18], 64, 64, 4
        $region32: #{tpu_custom_call.1} parent=11 // pred_fallthru
          _
        // Predicated region
        $region33: #{tpu_custom_call.1} parent=11 // pred_check
          %p376 = pneg %p204
        $region34: #{tpu_custom_call.1} parent=11 // pred_check_branch
          %378 = sbr.rel (%p376) target = $region36
        $region35: #{tpu_custom_call.1} parent=11 // pred_region
          %s380 = ssub.s32 16, 16
          %381 = vsyncadd [#allocation18], %s380
          %s383 = sshll.u32 [#allocation19], 4
          %s384 = int_to_ptr.vmem [resolvable:$true] %s383
          %386 = dma.hbm_to_vmem [thread:$0]  %s8, 16, %s384, [#allocation18]
        $region36: #{tpu_custom_call.1} parent=11 // pred_fallthru
          _
        // Predicated region
        $region37: #{tpu_custom_call.1} parent=11 // pred_check
          %p387 = pneg %p225
        $region38: #{tpu_custom_call.1} parent=11 // pred_check_branch
          %389 = sbr.rel (%p387) target = $region40
        $region39: #{tpu_custom_call.1} parent=11 // pred_region
          %s391 = ssub.s32 16, 16
          %392 = vsyncadd [#allocation21], %s391
          %s394 = sshll.u32 [#allocation20], 4
          %s395 = int_to_ptr.vmem [resolvable:$true] %s394
          %397 = dma.hbm_to_vmem [thread:$0]  %s9, 16, %s395, [#allocation21]
        $region40: #{tpu_custom_call.1} parent=11 // pred_fallthru
          _
        // Predicated region
        $region41: #{tpu_custom_call.1} parent=11 // pred_check
          %p398 = pneg %p246
        $region42: #{tpu_custom_call.1} parent=11 // pred_check_branch
          %400 = sbr.rel (%p398) target = $region44
        $region43: #{tpu_custom_call.1} parent=11 // pred_region
          _
        $region44: #{tpu_custom_call.1} parent=11 // pred_fallthru
          _
        // Predicated region
        $region45: #{tpu_custom_call.1} parent=11 // pred_check
          %p401 = pneg %p267
        $region46: #{tpu_custom_call.1} parent=11 // pred_check_branch
          %403 = sbr.rel (%p401) target = $region48
        $region47: #{tpu_custom_call.1} parent=11 // pred_region
          _
        $region48: #{tpu_custom_call.1} parent=11 // pred_fallthru
          _
        // Predicated region
        $region49: #{tpu_custom_call.1} parent=11 // pred_check
          %p404 = pneg %p288
        $region50: #{tpu_custom_call.1} parent=11 // pred_check_branch
          %406 = sbr.rel (%p404) target = $region52
        $region51: #{tpu_custom_call.1} parent=11 // pred_region
          _
        $region52: #{tpu_custom_call.1} parent=11 // pred_fallthru
          _
      $region12: #{tpu_custom_call.1} parent=5 // pred_fallthru
        _
      %p407 = scmp.lt.s32.totalorder %s36, 20
      // Predicated region
      $region53: #{tpu_custom_call.1} parent=5 // pred_check
        %p408 = pneg %p407
      $region54: #{tpu_custom_call.1} parent=5 // pred_check_branch
        %410 = sbr.rel (%p408) target = $region56
      $region55: #{tpu_custom_call.1} parent=5 // pred_region
        // Predicated region
        $region57: #{tpu_custom_call.1} parent=55 // pred_check
          %p411 = pneg %p72
        $region58: #{tpu_custom_call.1} parent=55 // pred_check_branch
          %413 = sbr.rel (%p411) target = $region60
        $region59: #{tpu_custom_call.1} parent=55 // pred_region
          %s414 = sand.u32 %s62, 1
          %s415 = scalar_lea.sflag [#allocation12], %s414
          %s416 = sand.u32 %s62, 1
          %s417 = smul.addr %s416, 8
          %s418 = scalar_lea.vmem [#allocation11], %s417
          %s419 = sld [smem:[#allocation9 + %s44]]
          %s421 = ssub.s32 128, 128
          %422 = vsyncadd %s415, %s421
          %s423 = smul.addr %s43, 4
          %s424 = sadd.s32 %s419, %s423
          %s425 = smul.addr %s424, 128
          %s426 = scalar_lea.hbm %s2, %s425
          %s428 = sshll.u32 %s418, 4
          %s429 = int_to_ptr.vmem [resolvable:$true] %s428
          %431 = dma.hbm_to_vmem [thread:$0]  %s426, 128, %s429, %s415
        $region60: #{tpu_custom_call.1} parent=55 // pred_fallthru
          _
      $region56: #{tpu_custom_call.1} parent=5 // pred_fallthru
        _
      %p432 = scmp.le.s32.totalorder 1, %s36
      %p433 = scmp.lt.s32.totalorder %s36, 21
      %p434 = pnand %p432, %p433
      %p435 = pneg %p434
      // Predicated region
      $region61: #{tpu_custom_call.1} parent=5 // pred_check
        _
      $region62: #{tpu_custom_call.1} parent=5 // pred_check_branch
        %437 = sbr.rel (%p434) target = $region64
      $region63: #{tpu_custom_call.1} parent=5 // pred_region
        %s438 = ssub.s32 %s36, 1
        %s439 = sand.u32 %s65, 1
        %s440 = scalar_lea.sflag [#allocation12], %s439
        %s441 = sand.u32 %s65, 1
        %s442 = smul.addr %s441, 8
        %s443 = scalar_lea.vmem [#allocation11], %s442
        // Predicated region
        $region65: #{tpu_custom_call.1} parent=63 // pred_check
          %p444 = pneg %p78
        $region66: #{tpu_custom_call.1} parent=63 // pred_check_branch
          %446 = sbr.rel (%p444) target = $region68
        $region67: #{tpu_custom_call.1} parent=63 // pred_region
          %447 = dma.done %s440, 128
        $region68: #{tpu_custom_call.1} parent=63 // pred_fallthru
          _
        // Predicated region
        $region69: #{tpu_custom_call.1} parent=63 // pred_check
          %p448 = pneg %p120
        $region70: #{tpu_custom_call.1} parent=63 // pred_check_branch
          %450 = sbr.rel (%p448) target = $region72
        $region71: #{tpu_custom_call.1} parent=63 // pred_region
          %451 = dma.done [#allocation15], 16
        $region72: #{tpu_custom_call.1} parent=63 // pred_fallthru
          _
        // Predicated region
        $region73: #{tpu_custom_call.1} parent=63 // pred_check
          %p452 = pneg %p162
        $region74: #{tpu_custom_call.1} parent=63 // pred_check_branch
          %454 = sbr.rel (%p452) target = $region76
        $region75: #{tpu_custom_call.1} parent=63 // pred_region
          %455 = dma.done [#allocation15], 256
        $region76: #{tpu_custom_call.1} parent=63 // pred_fallthru
          _
        // Predicated region
        $region77: #{tpu_custom_call.1} parent=63 // pred_check
          %p456 = pneg %p183
        $region78: #{tpu_custom_call.1} parent=63 // pred_check_branch
          %458 = sbr.rel (%p456) target = $region80
        $region79: #{tpu_custom_call.1} parent=63 // pred_region
          %459 = dma.done [#allocation18], 256
        $region80: #{tpu_custom_call.1} parent=63 // pred_fallthru
          _
        // Predicated region
        $region81: #{tpu_custom_call.1} parent=63 // pred_check
          %p460 = pneg %p204
        $region82: #{tpu_custom_call.1} parent=63 // pred_check_branch
          %462 = sbr.rel (%p460) target = $region84
        $region83: #{tpu_custom_call.1} parent=63 // pred_region
          %463 = dma.done [#allocation18], 16
        $region84: #{tpu_custom_call.1} parent=63 // pred_fallthru
          _
        // Predicated region
        $region85: #{tpu_custom_call.1} parent=63 // pred_check
          %p464 = pneg %p225
        $region86: #{tpu_custom_call.1} parent=63 // pred_check_branch
          %466 = sbr.rel (%p464) target = $region88
        $region87: #{tpu_custom_call.1} parent=63 // pred_region
          %467 = dma.done [#allocation21], 16
        $region88: #{tpu_custom_call.1} parent=63 // pred_fallthru
          _
        %s468 = sand.u32 %s65, 1
        %s469 = scalar_lea.sflag [#allocation12], %s468
        %s470 = sand.u32 %s65, 1
        %s471 = smul.addr %s470, 8
        %s472 = scalar_lea.vmem [#allocation11], %s471
        %p473 = pneg %p78
        %p474 = pneg %p75
        %p475 = pneg %p99
        %p476 = pneg %p96
        %p477 = pneg %p120
        %p478 = pneg %p117
        %p479 = pneg %p141
        %p480 = pneg %p138
        %p481 = pneg %p162
        %p482 = pneg %p159
        %p483 = pneg %p183
        %p484 = pneg %p180
        %p485 = pneg %p204
        %p486 = pneg %p201
        %p487 = pneg %p225
        %p488 = pneg %p222
        %p489 = pneg %p246
        %p490 = pneg %p243
        %p491 = pneg %p267
        %p492 = pneg %p264
        %p493 = pneg %p288
        %p494 = pneg %p285
        %p495 = pneg %p318
        %p496 = pneg %p315
        %s497 = sand.u32 %s305, 1
        %s498 = scalar_lea.sflag [#allocation13], %s497
        %s499 = sand.u32 %s305, 1
        %s500 = smul.addr %s499, 8
        %s501 = scalar_lea.vmem [#allocation22], %s500
        %s502 = sld [smem:[#allocation9 + %s46]]
        %s503 = sld [smem:[#allocation9 + %s46]]
        %s505 = sld [smem:[#allocation9 + %s46]]
        %s506 = sld [smem:[#allocation10 + %s46]]
        %p507 = scmp.eq.s32.totalorder %s506, %s505
        // Predicated region
        $region89: #{tpu_custom_call.1} parent=63 // pred_check
          %p508 = pneg %p507
        $region90: #{tpu_custom_call.1} parent=63 // pred_check_branch
          %510 = sbr.rel (%p508) target = $region92
        $region91: #{tpu_custom_call.1} parent=63 // pred_region
          %v511 = vld [vmem:[%s443] sm:$0xff]
          %vm512 = vcmask 261120
          %v513 = vsel %vm512, %v511, 0.0
          %514 = vadd.xlane.f32.xlu0 %v513
          %v515 = vpop.xlane.xlu0 %514
          %v516 = vrcp.pop 32.0
          %v517 = vmul.f32 %v515, %v516
          %v518 = vsub.f32 %v511, %v517
          %v519 = vmul.f32 %v518, %v518
          %v520 = vsel %vm512, %v519, 0.0
          %521 = vadd.xlane.f32.xlu0 %v520
          %v522 = vpop.xlane.xlu0 %521
          %v523 = vmul.f32 %v522, %v516
          %v524 = vadd.f32 %v523, 1e-05
          %v525 = vrsqrt.pop %v524
          %v526 = vmul.f32 %v518, %v525
          %v527 = vld [vmem:[%s3] sm:$0x1]
          %v529 = vlaneseq
          %v530 = vshrl.u32 %v529, 7
          %v531 = vsub.s32 0, %v530
          %v532 = vrot.slane %v527, %v531
          %v534 = vmul.f32 %v526, %v532
          %v535 = vld [vmem:[#allocation14] sm:$0x1]
          %v537 = vlaneseq
          %v538 = vshrl.u32 %v537, 7
          %v539 = vsub.s32 0, %v538
          %v540 = vrot.slane %v535, %v539
          %v542 = vadd.f32 %v534, %v540
          %v543 = vpack.c.bf16 %v542, %v542
          %v544 = vld [vmem:[%s5] sm:$0xf]
          %v545 = vld [vmem:[%s5 + $0x4] sm:$0xf]
          %v546 = vld [vmem:[%s5 + $0x8] sm:$0xf]
          %v547 = vld [vmem:[%s5 + $0xc] sm:$0xf]
          %v548 = vld [vmem:[#allocation19] sm:$0x1]
          %v550 = vlaneseq
          %v551 = vshrl.u32 %v550, 7
          %v552 = vsub.s32 0, %v551
          %v553 = vrot.slane %v548, %v552
          %v559 = vunpack.c.l.b16 %v544
          %v560 = vunpack.c.l.b16 %v545
          %v561 = vunpack.c.l.b16 %v546
          %v562 = vunpack.c.l.b16 %v547
          %v563 = vpack.c.b16 %v560, %v559
          %v564 = vpack.c.b16 %v562, %v561
          %v568 = vsel %vm512, %v543, 0
          %570 = vmatprep.subr.bf16.mxu0 0
          %571 = vmatpush1.bf16.msra.mxu0 %v563
          %572 = vmatprep.subr.bf16.mxu0 0
          %573 = vmatpush1.bf16.msra.mxu0 %v564
          %574 = vmatprep.subr.bf16.mxu0 0
          %575 = vmatpush1.bf16.msra.mxu0 0
          %576 = vmatprep.subr.bf16.mxu0 0
          %577 = vmatpush1.bf16.msra.mxu0 0
          %578 = vmatprep.subr.bf16.mxu0 0
          %579 = vmatpush1.bf16.msra.mxu0 0
          %580 = vmatprep.subr.bf16.mxu0 0
          %581 = vmatpush1.bf16.msra.mxu0 0
          %582 = vmatprep.subr.bf16.mxu0 0
          %583 = vmatpush1.bf16.msra.mxu0 0
          %584 = vmatprep.subr.bf16.mxu0 0
          %585 = vmatpush1.bf16.msra.mxu0 0
          %586 = vmatprep.subr.bf16.mxu0 0
          %587 = vmatpush1.bf16.msra.mxu0 0
          %588 = vmatprep.subr.bf16.mxu0 0
          %589 = vmatpush1.bf16.msra.mxu0 0
          %590 = vmatprep.subr.bf16.mxu0 0
          %591 = vmatpush1.bf16.msra.mxu0 0
          %592 = vmatprep.subr.bf16.mxu0 0
          %593 = vmatpush1.bf16.msra.mxu0 0
          %594 = vmatprep.subr.bf16.mxu0 0
          %595 = vmatpush1.bf16.msra.mxu0 0
          %596 = vmatprep.subr.bf16.mxu0 0
          %597 = vmatpush1.bf16.msra.mxu0 0
          %598 = vmatprep.subr.bf16.mxu0 0
          %599 = vmatpush1.bf16.msra.mxu0 0
          %600 = vmatprep.subr.bf16.mxu0 0
          %601 = vmatpush1.bf16.msra.mxu0 0
          %602 = vmatprep.mubr.bf16.mxu0 0
          %603 = vmatmul.mubr.bf16.gmra.mrb[0].mxu0 %v568
          %v604 = vpop.f32.mrb[0].mxu0
          %v605 = vadd.f32 %v553, %v604
          %v606 = vpop.f32.mrb[0].mxu0
          %v607 = vpop.f32.mrb[0].mxu0
          %v608 = vpop.f32.mrb[0].mxu0
          %609 = vdwg.mxu0
          %v610 = vmul.f32 %v605, 0.25
          %v611 = vld [vmem:[#allocation16] sm:$0xf]
          %v612 = vld [vmem:[#allocation16 + $0x4] sm:$0xf]
          %v613 = vld [vmem:[#allocation16 + $0x8] sm:$0xf]
          %v614 = vld [vmem:[#allocation16 + $0xc] sm:$0xf]
          %v615 = vld [vmem:[#allocation20] sm:$0x1]
          %v617 = vlaneseq
          %v618 = vshrl.u32 %v617, 7
          %v619 = vsub.s32 0, %v618
          %v620 = vrot.slane %v615, %v619
          %v626 = vunpack.c.l.b16 %v611
          %v627 = vunpack.c.l.b16 %v612
          %v628 = vunpack.c.l.b16 %v613
          %v629 = vunpack.c.l.b16 %v614
          %v630 = vpack.c.b16 %v627, %v626
          %v631 = vpack.c.b16 %v629, %v628
          %634 = vmatprep.subr.bf16.mxu0 0
          %635 = vmatpush1.bf16.msra.mxu0 %v630
          %636 = vmatprep.subr.bf16.mxu0 0
          %637 = vmatpush1.bf16.msra.mxu0 %v631
          %638 = vmatprep.subr.bf16.mxu0 0
          %639 = vmatpush1.bf16.msra.mxu0 0
          %640 = vmatprep.subr.bf16.mxu0 0
          %641 = vmatpush1.bf16.msra.mxu0 0
          %642 = vmatprep.subr.bf16.mxu0 0
          %643 = vmatpush1.bf16.msra.mxu0 0
          %644 = vmatprep.subr.bf16.mxu0 0
          %645 = vmatpush1.bf16.msra.mxu0 0
          %646 = vmatprep.subr.bf16.mxu0 0
          %647 = vmatpush1.bf16.msra.mxu0 0
          %648 = vmatprep.subr.bf16.mxu0 0
          %649 = vmatpush1.bf16.msra.mxu0 0
          %650 = vmatprep.subr.bf16.mxu0 0
          %651 = vmatpush1.bf16.msra.mxu0 0
          %652 = vmatprep.subr.bf16.mxu0 0
          %653 = vmatpush1.bf16.msra.mxu0 0
          %654 = vmatprep.subr.bf16.mxu0 0
          %655 = vmatpush1.bf16.msra.mxu0 0
          %656 = vmatprep.subr.bf16.mxu0 0
          %657 = vmatpush1.bf16.msra.mxu0 0
          %658 = vmatprep.subr.bf16.mxu0 0
          %659 = vmatpush1.bf16.msra.mxu0 0
          %660 = vmatprep.subr.bf16.mxu0 0
          %661 = vmatpush1.bf16.msra.mxu0 0
          %662 = vmatprep.subr.bf16.mxu0 0
          %663 = vmatpush1.bf16.msra.mxu0 0
          %664 = vmatprep.subr.bf16.mxu0 0
          %665 = vmatpush1.bf16.msra.mxu0 0
          %666 = vmatprep.mubr.bf16.mxu0 0
          %667 = vmatmul.mubr.bf16.gmra.mrb[0].mxu0 %v568
          %v668 = vpop.f32.mrb[0].mxu0
          %v669 = vadd.f32 %v620, %v668
          %v670 = vpop.f32.mrb[0].mxu0
          %v671 = vpop.f32.mrb[0].mxu0
          %v672 = vpop.f32.mrb[0].mxu0
          %673 = vdwg.mxu0
          %v674 = vld [vmem:[#allocation17] sm:$0xf]
          %v675 = vld [vmem:[#allocation17 + $0x4] sm:$0xf]
          %v676 = vld [vmem:[#allocation17 + $0x8] sm:$0xf]
          %v677 = vld [vmem:[#allocation17 + $0xc] sm:$0xf]
          %v678 = vld [vmem:[%s10] sm:$0x1]
          %v680 = vlaneseq
          %v681 = vshrl.u32 %v680, 7
          %v682 = vsub.s32 0, %v681
          %v683 = vrot.slane %v678, %v682
          %v689 = vunpack.c.l.b16 %v674
          %v690 = vunpack.c.l.b16 %v675
          %v691 = vunpack.c.l.b16 %v676
          %v692 = vunpack.c.l.b16 %v677
          %v693 = vpack.c.b16 %v690, %v689
          %v694 = vpack.c.b16 %v692, %v691
          %697 = vmatprep.subr.bf16.mxu0 0
          %698 = vmatpush1.bf16.msra.mxu0 %v693
          %699 = vmatprep.subr.bf16.mxu0 0
          %700 = vmatpush1.bf16.msra.mxu0 %v694
          %701 = vmatprep.subr.bf16.mxu0 0
          %702 = vmatpush1.bf16.msra.mxu0 0
          %703 = vmatprep.subr.bf16.mxu0 0
          %704 = vmatpush1.bf16.msra.mxu0 0
          %705 = vmatprep.subr.bf16.mxu0 0
          %706 = vmatpush1.bf16.msra.mxu0 0
          %707 = vmatprep.subr.bf16.mxu0 0
          %708 = vmatpush1.bf16.msra.mxu0 0
          %709 = vmatprep.subr.bf16.mxu0 0
          %710 = vmatpush1.bf16.msra.mxu0 0
          %711 = vmatprep.subr.bf16.mxu0 0
          %712 = vmatpush1.bf16.msra.mxu0 0
          %713 = vmatprep.subr.bf16.mxu0 0
          %714 = vmatpush1.bf16.msra.mxu0 0
          %715 = vmatprep.subr.bf16.mxu0 0
          %716 = vmatpush1.bf16.msra.mxu0 0
          %717 = vmatprep.subr.bf16.mxu0 0
          %718 = vmatpush1.bf16.msra.mxu0 0
          %719 = vmatprep.subr.bf16.mxu0 0
          %720 = vmatpush1.bf16.msra.mxu0 0
          %721 = vmatprep.subr.bf16.mxu0 0
          %722 = vmatpush1.bf16.msra.mxu0 0
          %723 = vmatprep.subr.bf16.mxu0 0
          %724 = vmatpush1.bf16.msra.mxu0 0
          %725 = vmatprep.subr.bf16.mxu0 0
          %726 = vmatpush1.bf16.msra.mxu0 0
          %727 = vmatprep.subr.bf16.mxu0 0
          %728 = vmatpush1.bf16.msra.mxu0 0
          %729 = vmatprep.mubr.bf16.mxu0 0
          %730 = vmatmul.mubr.bf16.gmra.mrb[0].mxu0 %v568
          %v731 = vpop.f32.mrb[0].mxu0
          %v732 = vadd.f32 %v683, %v731
          %v733 = vpop.f32.mrb[0].mxu0
          %v734 = vpop.f32.mrb[0].mxu0
          %v735 = vpop.f32.mrb[0].mxu0
          %736 = vdwg.mxu0
          %v737 = vpack.c.bf16 %v610, %v610
          %vm738 = vcmask 257024
          %739 = vst.msk [vmem:[#allocation2] sm:$0xf] %vm738, %v737
          %v740 = vpack.c.bf16 %v669, %v669
          %v741 = vpack.c.bf16 %v732, %v732
          %s742 = smul.addr %s506, 4
          %s743 = scalar_lea.vmem [#allocation3], %s742
          %744 = vst.msk [vmem:[%s743] sm:$0xf] %vm738, %v740
          %s745 = smul.addr %s506, 4
          %s746 = scalar_lea.vmem [#allocation4], %s745
          %747 = vst.msk [vmem:[%s746] sm:$0xf] %vm738, %v741
          %vm748 = vcmask 7168
          %749 = vst.msk [vmem:[#allocation5] sm:$0xff] %vm748, -1e+30
          %750 = vst.msk [vmem:[#allocation5 + $0x8] sm:$0xff] %vm748, -1e+30
          %751 = vst.msk [vmem:[#allocation6] sm:$0xff] %vm748, 0.0
          %752 = vst.msk [vmem:[#allocation6 + $0x8] sm:$0xff] %vm748, 0.0
          %vm753 = vcmask 130048
          %754 = vst.msk [vmem:[#allocation7] sm:$0xff] %vm753, 0.0
          %755 = vst.msk [vmem:[#allocation7 + $0x8] sm:$0xff] %vm753, 0.0
          %v756 = vld [vmem:[#allocation2] sm:$0xf]
          %v757 = vlaneseq
          %v758 = vshrl.u32 %v757, 7
          %v759 = vlaneseq
          %v760 = vand.u32 %v759, 127
          %vm761 = vcmp.le.s32.totalorder %v760, %v758
          %v763 = vsel %vm753, %v756, 0
          %v766 = vsel %vm753, %v740, 0
          %768 = vmatprep.subr.bf16.mxu0 0
          %769 = vmatpush1.bf16.xpose.msra.mxu0 %v766
          %770 = vmatprep.subr.bf16.mxu0 0
          %771 = vmatpush1.bf16.xpose.msra.mxu0 0
          %772 = vmatprep.subr.bf16.mxu0 0
          %773 = vmatpush1.bf16.xpose.msra.mxu0 0
          %774 = vmatprep.subr.bf16.mxu0 0
          %775 = vmatpush1.bf16.xpose.msra.mxu0 0
          %776 = vmatprep.subr.bf16.mxu0 0
          %777 = vmatpush1.bf16.xpose.msra.mxu0 0
          %778 = vmatprep.subr.bf16.mxu0 0
          %779 = vmatpush1.bf16.xpose.msra.mxu0 0
          %780 = vmatprep.subr.bf16.mxu0 0
          %781 = vmatpush1.bf16.xpose.msra.mxu0 0
          %782 = vmatprep.subr.bf16.mxu0 0
          %783 = vmatpush1.bf16.xpose.msra.mxu0 0
          %784 = vmatprep.subr.bf16.mxu0 0
          %785 = vmatpush1.bf16.xpose.msra.mxu0 0
          %786 = vmatprep.subr.bf16.mxu0 0
          %787 = vmatpush1.bf16.xpose.msra.mxu0 0
          %788 = vmatprep.subr.bf16.mxu0 0
          %789 = vmatpush1.bf16.xpose.msra.mxu0 0
          %790 = vmatprep.subr.bf16.mxu0 0
          %791 = vmatpush1.bf16.xpose.msra.mxu0 0
          %792 = vmatprep.subr.bf16.mxu0 0
          %793 = vmatpush1.bf16.xpose.msra.mxu0 0
          %794 = vmatprep.subr.bf16.mxu0 0
          %795 = vmatpush1.bf16.xpose.msra.mxu0 0
          %796 = vmatprep.subr.bf16.mxu0 0
          %797 = vmatpush1.bf16.xpose.msra.mxu0 0
          %798 = vmatprep.subr.bf16.mxu0 0
          %799 = vmatpush1.bf16.xpose.msra.mxu0 0
          %800 = vmatprep.mubr.bf16.mxu0 0
          %801 = vmatmul.mubr.bf16.gmra.mrb[0].mxu0 %v763
          %v802 = vpop.f32.mrb[0].mxu0
          %v803 = vadd.f32 0.0, %v802
          %v804 = vpop.f32.mrb[0].mxu0
          %v805 = vpop.f32.mrb[0].mxu0
          %v806 = vpop.f32.mrb[0].mxu0
          %807 = vdwg.mxu0
          %v808 = vsel %vm761, %v803, -1e+30
          %v809 = vld [vmem:[#allocation5] sm:$0xff]
          %vm810 = vcmask 64512
          %v811 = vsel %vm810, %v808, -inf
          %812 = vmax.xlane.f32.xlu0 %v811
          %v813 = vpop.xlane.xlu0 %812
          %v814 = vmax.f32 %v809, %v813
          %v815 = vsub.f32 %v809, %v814
          %v816 = vmul.f32 %v815, 1.442695
          %v817 = vpow.pop %v816
          %819 = vset.pattern.permute.xlu0 0
          %820 = vperm.xlu0 %819, %v814
          %v821 = vpop.permute.xlu0 %820
          %v823 = vsub.f32 %v808, %v821
          %v824 = vmul.f32 %v823, 1.442695
          %v825 = vpow.pop %v824
          %v826 = vld [vmem:[#allocation6] sm:$0xff]
          %v827 = vmul.f32 %v817, %v826
          %v828 = vsel %vm810, %v825, 0.0
          %829 = vadd.xlane.f32.xlu0 %v828
          %v830 = vpop.xlane.xlu0 %829
          %v831 = vadd.f32 %v827, %v830
          %832 = vst.msk [vmem:[#allocation6] sm:$0xff] %vm748, %v831
          %v833 = vld [vmem:[#allocation7] sm:$0xff]
          %835 = vset.pattern.permute.xlu0 0
          %836 = vperm.xlu0 %835, %v817
          %v837 = vpop.permute.xlu0 %836
          %v839 = vmul.f32 %v837, %v833
          %v840 = vpack.c.bf16 %v825, %v825
          %v842 = vsel %vm810, %v840, 0
          %vm844 = vcmask 1043456
          %v846 = vsel %vm844, %v741, 0
          %848 = vmatprep.subr.bf16.mxu0 0
          %849 = vmatpush1.bf16.msra.mxu0 %v846
          %850 = vmatprep.subr.bf16.mxu0 0
          %851 = vmatpush1.bf16.msra.mxu0 0
          %852 = vmatprep.subr.bf16.mxu0 0
          %853 = vmatpush1.bf16.msra.mxu0 0
          %854 = vmatprep.subr.bf16.mxu0 0
          %855 = vmatpush1.bf16.msra.mxu0 0
          %856 = vmatprep.subr.bf16.mxu0 0
          %857 = vmatpush1.bf16.msra.mxu0 0
          %858 = vmatprep.subr.bf16.mxu0 0
          %859 = vmatpush1.bf16.msra.mxu0 0
          %860 = vmatprep.subr.bf16.mxu0 0
          %861 = vmatpush1.bf16.msra.mxu0 0
          %862 = vmatprep.subr.bf16.mxu0 0
          %863 = vmatpush1.bf16.msra.mxu0 0
          %864 = vmatprep.subr.bf16.mxu0 0
          %865 = vmatpush1.bf16.msra.mxu0 0
          %866 = vmatprep.subr.bf16.mxu0 0
          %867 = vmatpush1.bf16.msra.mxu0 0
          %868 = vmatprep.subr.bf16.mxu0 0
          %869 = vmatpush1.bf16.msra.mxu0 0
          %870 = vmatprep.subr.bf16.mxu0 0
          %871 = vmatpush1.bf16.msra.mxu0 0
          %872 = vmatprep.subr.bf16.mxu0 0
          %873 = vmatpush1.bf16.msra.mxu0 0
          %874 = vmatprep.subr.bf16.mxu0 0
          %875 = vmatpush1.bf16.msra.mxu0 0
          %876 = vmatprep.subr.bf16.mxu0 0
          %877 = vmatpush1.bf16.msra.mxu0 0
          %878 = vmatprep.subr.bf16.mxu0 0
          %879 = vmatpush1.bf16.msra.mxu0 0
          %880 = vmatprep.mubr.bf16.mxu0 0
          %881 = vmatmul.mubr.bf16.gmra.mrb[0].mxu0 %v842
          %v882 = vpop.f32.mrb[0].mxu0
          %v883 = vadd.f32 0.0, %v882
          %v884 = vpop.f32.mrb[0].mxu0
          %v885 = vpop.f32.mrb[0].mxu0
          %v886 = vpop.f32.mrb[0].mxu0
          %887 = vdwg.mxu0
          %v888 = vadd.f32 %v839, %v883
          %889 = vst.msk [vmem:[#allocation7] sm:$0xff] %vm753, %v888
          %890 = vst.msk [vmem:[#allocation5] sm:$0xff] %vm748, %v814
          %v892 = vunpack.c.l.b16 %v756
          %v893 = vpack.c.b16 %v892, %v892
          %894 = vrot.lane.b32.xlu0 %v893, 112
          %v895 = vpop.permute.xlu0 %894
          %897 = vrot.lane.b32.xlu0 %v740, 112
          %v898 = vpop.permute.xlu0 %897
          %v900 = vsel %vm753, %v895, 0
          %v903 = vsel %vm753, %v898, 0
          %905 = vmatprep.subr.bf16.mxu0 0
          %906 = vmatpush1.bf16.xpose.msra.mxu0 %v903
          %907 = vmatprep.subr.bf16.mxu0 0
          %908 = vmatpush1.bf16.xpose.msra.mxu0 0
          %909 = vmatprep.subr.bf16.mxu0 0
          %910 = vmatpush1.bf16.xpose.msra.mxu0 0
          %911 = vmatprep.subr.bf16.mxu0 0
          %912 = vmatpush1.bf16.xpose.msra.mxu0 0
          %913 = vmatprep.subr.bf16.mxu0 0
          %914 = vmatpush1.bf16.xpose.msra.mxu0 0
          %915 = vmatprep.subr.bf16.mxu0 0
          %916 = vmatpush1.bf16.xpose.msra.mxu0 0
          %917 = vmatprep.subr.bf16.mxu0 0
          %918 = vmatpush1.bf16.xpose.msra.mxu0 0
          %919 = vmatprep.subr.bf16.mxu0 0
          %920 = vmatpush1.bf16.xpose.msra.mxu0 0
          %921 = vmatprep.subr.bf16.mxu0 0
          %922 = vmatpush1.bf16.xpose.msra.mxu0 0
          %923 = vmatprep.subr.bf16.mxu0 0
          %924 = vmatpush1.bf16.xpose.msra.mxu0 0
          %925 = vmatprep.subr.bf16.mxu0 0
          %926 = vmatpush1.bf16.xpose.msra.mxu0 0
          %927 = vmatprep.subr.bf16.mxu0 0
          %928 = vmatpush1.bf16.xpose.msra.mxu0 0
          %929 = vmatprep.subr.bf16.mxu0 0
          %930 = vmatpush1.bf16.xpose.msra.mxu0 0
          %931 = vmatprep.subr.bf16.mxu0 0
          %932 = vmatpush1.bf16.xpose.msra.mxu0 0
          %933 = vmatprep.subr.bf16.mxu0 0
          %934 = vmatpush1.bf16.xpose.msra.mxu0 0
          %935 = vmatprep.subr.bf16.mxu0 0
          %936 = vmatpush1.bf16.xpose.msra.mxu0 0
          %937 = vmatprep.mubr.bf16.mxu0 0
          %938 = vmatmul.mubr.bf16.gmra.mrb[0].mxu0 %v900
          %v939 = vpop.f32.mrb[0].mxu0
          %v940 = vadd.f32 0.0, %v939
          %v941 = vpop.f32.mrb[0].mxu0
          %v942 = vpop.f32.mrb[0].mxu0
          %v943 = vpop.f32.mrb[0].mxu0
          %944 = vdwg.mxu0
          %v945 = vsel %vm761, %v940, -1e+30
          %s946 = scalar_lea.vmem [#allocation5], 8
          %v947 = vld [vmem:[%s946] sm:$0xff]
          %v948 = vsel %vm810, %v945, -inf
          %949 = vmax.xlane.f32.xlu0 %v948
          %v950 = vpop.xlane.xlu0 %949
          %v951 = vmax.f32 %v947, %v950
          %v952 = vsub.f32 %v947, %v951
          %v953 = vmul.f32 %v952, 1.442695
          %v954 = vpow.pop %v953
          %956 = vset.pattern.permute.xlu0 0
          %957 = vperm.xlu0 %956, %v951
          %v958 = vpop.permute.xlu0 %957
          %v960 = vsub.f32 %v945, %v958
          %v961 = vmul.f32 %v960, 1.442695
          %v962 = vpow.pop %v961
          %s963 = scalar_lea.vmem [#allocation6], 8
          %v964 = vld [vmem:[%s963] sm:$0xff]
          %v965 = vmul.f32 %v954, %v964
          %v966 = vsel %vm810, %v962, 0.0
          %967 = vadd.xlane.f32.xlu0 %v966
          %v968 = vpop.xlane.xlu0 %967
          %v969 = vadd.f32 %v965, %v968
          %970 = vst.msk [vmem:[%s963] sm:$0xff] %vm748, %v969
          %s971 = scalar_lea.vmem [#allocation7], 8
          %v972 = vld [vmem:[%s971] sm:$0xff]
          %974 = vset.pattern.permute.xlu0 0
          %975 = vperm.xlu0 %974, %v954
          %v976 = vpop.permute.xlu0 %975
          %v978 = vmul.f32 %v976, %v972
          %v979 = vpack.c.bf16 %v962, %v962
          %981 = vrot.lane.b32.xlu0 %v741, 112
          %v982 = vpop.permute.xlu0 %981
          %v984 = vsel %vm810, %v979, 0
          %v987 = vsel %vm844, %v982, 0
          %989 = vmatprep.subr.bf16.mxu0 0
          %990 = vmatpush1.bf16.msra.mxu0 %v987
          %991 = vmatprep.subr.bf16.mxu0 0
          %992 = vmatpush1.bf16.msra.mxu0 0
          %993 = vmatprep.subr.bf16.mxu0 0
          %994 = vmatpush1.bf16.msra.mxu0 0
          %995 = vmatprep.subr.bf16.mxu0 0
          %996 = vmatpush1.bf16.msra.mxu0 0
          %997 = vmatprep.subr.bf16.mxu0 0
          %998 = vmatpush1.bf16.msra.mxu0 0
          %999 = vmatprep.subr.bf16.mxu0 0
          %1000 = vmatpush1.bf16.msra.mxu0 0
          %1001 = vmatprep.subr.bf16.mxu0 0
          %1002 = vmatpush1.bf16.msra.mxu0 0
          %1003 = vmatprep.subr.bf16.mxu0 0
          %1004 = vmatpush1.bf16.msra.mxu0 0
          %1005 = vmatprep.subr.bf16.mxu0 0
          %1006 = vmatpush1.bf16.msra.mxu0 0
          %1007 = vmatprep.subr.bf16.mxu0 0
          %1008 = vmatpush1.bf16.msra.mxu0 0
          %1009 = vmatprep.subr.bf16.mxu0 0
          %1010 = vmatpush1.bf16.msra.mxu0 0
          %1011 = vmatprep.subr.bf16.mxu0 0
          %1012 = vmatpush1.bf16.msra.mxu0 0
          %1013 = vmatprep.subr.bf16.mxu0 0
          %1014 = vmatpush1.bf16.msra.mxu0 0
          %1015 = vmatprep.subr.bf16.mxu0 0
          %1016 = vmatpush1.bf16.msra.mxu0 0
          %1017 = vmatprep.subr.bf16.mxu0 0
          %1018 = vmatpush1.bf16.msra.mxu0 0
          %1019 = vmatprep.subr.bf16.mxu0 0
          %1020 = vmatpush1.bf16.msra.mxu0 0
          %1021 = vmatprep.mubr.bf16.mxu0 0
          %1022 = vmatmul.mubr.bf16.gmra.mrb[0].mxu0 %v984
          %v1023 = vpop.f32.mrb[0].mxu0
          %v1024 = vadd.f32 0.0, %v1023
          %v1025 = vpop.f32.mrb[0].mxu0
          %v1026 = vpop.f32.mrb[0].mxu0
          %v1027 = vpop.f32.mrb[0].mxu0
          %1028 = vdwg.mxu0
          %v1029 = vadd.f32 %v978, %v1024
          %1030 = vst.msk [vmem:[%s971] sm:$0xff] %vm753, %v1029
          %1031 = vst.msk [vmem:[%s946] sm:$0xff] %vm748, %v951
        $region92: #{tpu_custom_call.1} parent=63 // pred_fallthru
          _
        %p1032 = scmp.lt.s32.totalorder %s506, %s505
        // Predicated region
        $region93: #{tpu_custom_call.1} parent=63 // pred_check
          %p1033 = pneg %p1032
        $region94: #{tpu_custom_call.1} parent=63 // pred_check_branch
          %1035 = sbr.rel (%p1033) target = $region96
        $region95: #{tpu_custom_call.1} parent=63 // pred_region
          %s1036 = smul.addr %s506, 4
          %s1037 = scalar_lea.vmem [#allocation3], %s1036
          %v1038 = vld [vmem:[%s1037] sm:$0xf]
          %s1039 = smul.addr %s506, 4
          %s1040 = scalar_lea.vmem [#allocation4], %s1039
          %v1041 = vld [vmem:[%s1040] sm:$0xf]
          %v1042 = vld [vmem:[#allocation2] sm:$0xf]
          %vm1043 = vcmask 130048
          %v1045 = vsel %vm1043, %v1042, 0
          %v1048 = vsel %vm1043, %v1038, 0
          %1050 = vmatprep.subr.bf16.mxu0 0
          %1051 = vmatpush1.bf16.xpose.msra.mxu0 %v1048
          %1052 = vmatprep.subr.bf16.mxu0 0
          %1053 = vmatpush1.bf16.xpose.msra.mxu0 0
          %1054 = vmatprep.subr.bf16.mxu0 0
          %1055 = vmatpush1.bf16.xpose.msra.mxu0 0
          %1056 = vmatprep.subr.bf16.mxu0 0
          %1057 = vmatpush1.bf16.xpose.msra.mxu0 0
          %1058 = vmatprep.subr.bf16.mxu0 0
          %1059 = vmatpush1.bf16.xpose.msra.mxu0 0
          %1060 = vmatprep.subr.bf16.mxu0 0
          %1061 = vmatpush1.bf16.xpose.msra.mxu0 0
          %1062 = vmatprep.subr.bf16.mxu0 0
          %1063 = vmatpush1.bf16.xpose.msra.mxu0 0
          %1064 = vmatprep.subr.bf16.mxu0 0
          %1065 = vmatpush1.bf16.xpose.msra.mxu0 0
          %1066 = vmatprep.subr.bf16.mxu0 0
          %1067 = vmatpush1.bf16.xpose.msra.mxu0 0
          %1068 = vmatprep.subr.bf16.mxu0 0
          %1069 = vmatpush1.bf16.xpose.msra.mxu0 0
          %1070 = vmatprep.subr.bf16.mxu0 0
          %1071 = vmatpush1.bf16.xpose.msra.mxu0 0
          %1072 = vmatprep.subr.bf16.mxu0 0
          %1073 = vmatpush1.bf16.xpose.msra.mxu0 0
          %1074 = vmatprep.subr.bf16.mxu0 0
          %1075 = vmatpush1.bf16.xpose.msra.mxu0 0
          %1076 = vmatprep.subr.bf16.mxu0 0
          %1077 = vmatpush1.bf16.xpose.msra.mxu0 0
          %1078 = vmatprep.subr.bf16.mxu0 0
          %1079 = vmatpush1.bf16.xpose.msra.mxu0 0
          %1080 = vmatprep.subr.bf16.mxu0 0
          %1081 = vmatpush1.bf16.xpose.msra.mxu0 0
          %1082 = vmatprep.mubr.bf16.mxu0 0
          %1083 = vmatmul.mubr.bf16.gmra.mrb[0].mxu0 %v1045
          %v1084 = vpop.f32.mrb[0].mxu0
          %v1085 = vadd.f32 0.0, %v1084
          %v1086 = vpop.f32.mrb[0].mxu0
          %v1087 = vpop.f32.mrb[0].mxu0
          %v1088 = vpop.f32.mrb[0].mxu0
          %1089 = vdwg.mxu0
          %v1090 = vld [vmem:[#allocation5] sm:$0xff]
          %vm1091 = vcmask 64512
          %v1092 = vsel %vm1091, %v1085, -inf
          %1093 = vmax.xlane.f32.xlu0 %v1092
          %v1094 = vpop.xlane.xlu0 %1093
          %v1095 = vmax.f32 %v1090, %v1094
          %v1096 = vsub.f32 %v1090, %v1095
          %v1097 = vmul.f32 %v1096, 1.442695
          %v1098 = vpow.pop %v1097
          %1100 = vset.pattern.permute.xlu0 0
          %1101 = vperm.xlu0 %1100, %v1095
          %v1102 = vpop.permute.xlu0 %1101
          %v1104 = vsub.f32 %v1085, %v1102
          %v1105 = vmul.f32 %v1104, 1.442695
          %v1106 = vpow.pop %v1105
          %v1107 = vld [vmem:[#allocation6] sm:$0xff]
          %v1108 = vmul.f32 %v1098, %v1107
          %v1109 = vsel %vm1091, %v1106, 0.0
          %1110 = vadd.xlane.f32.xlu0 %v1109
          %v1111 = vpop.xlane.xlu0 %1110
          %v1112 = vadd.f32 %v1108, %v1111
          %vm1113 = vcmask 7168
          %1114 = vst.msk [vmem:[#allocation6] sm:$0xff] %vm1113, %v1112
          %v1115 = vld [vmem:[#allocation7] sm:$0xff]
          %1117 = vset.pattern.permute.xlu0 0
          %1118 = vperm.xlu0 %1117, %v1098
          %v1119 = vpop.permute.xlu0 %1118
          %v1121 = vmul.f32 %v1119, %v1115
          %v1122 = vpack.c.bf16 %v1106, %v1106
          %v1124 = vsel %vm1091, %v1122, 0
          %vm1126 = vcmask 1043456
          %v1128 = vsel %vm1126, %v1041, 0
          %1130 = vmatprep.subr.bf16.mxu0 0
          %1131 = vmatpush1.bf16.msra.mxu0 %v1128
          %1132 = vmatprep.subr.bf16.mxu0 0
          %1133 = vmatpush1.bf16.msra.mxu0 0
          %1134 = vmatprep.subr.bf16.mxu0 0
          %1135 = vmatpush1.bf16.msra.mxu0 0
          %1136 = vmatprep.subr.bf16.mxu0 0
          %1137 = vmatpush1.bf16.msra.mxu0 0
          %1138 = vmatprep.subr.bf16.mxu0 0
          %1139 = vmatpush1.bf16.msra.mxu0 0
          %1140 = vmatprep.subr.bf16.mxu0 0
          %1141 = vmatpush1.bf16.msra.mxu0 0
          %1142 = vmatprep.subr.bf16.mxu0 0
          %1143 = vmatpush1.bf16.msra.mxu0 0
          %1144 = vmatprep.subr.bf16.mxu0 0
          %1145 = vmatpush1.bf16.msra.mxu0 0
          %1146 = vmatprep.subr.bf16.mxu0 0
          %1147 = vmatpush1.bf16.msra.mxu0 0
          %1148 = vmatprep.subr.bf16.mxu0 0
          %1149 = vmatpush1.bf16.msra.mxu0 0
          %1150 = vmatprep.subr.bf16.mxu0 0
          %1151 = vmatpush1.bf16.msra.mxu0 0
          %1152 = vmatprep.subr.bf16.mxu0 0
          %1153 = vmatpush1.bf16.msra.mxu0 0
          %1154 = vmatprep.subr.bf16.mxu0 0
          %1155 = vmatpush1.bf16.msra.mxu0 0
          %1156 = vmatprep.subr.bf16.mxu0 0
          %1157 = vmatpush1.bf16.msra.mxu0 0
          %1158 = vmatprep.subr.bf16.mxu0 0
          %1159 = vmatpush1.bf16.msra.mxu0 0
          %1160 = vmatprep.subr.bf16.mxu0 0
          %1161 = vmatpush1.bf16.msra.mxu0 0
          %1162 = vmatprep.mubr.bf16.mxu0 0
          %1163 = vmatmul.mubr.bf16.gmra.mrb[0].mxu0 %v1124
          %v1164 = vpop.f32.mrb[0].mxu0
          %v1165 = vadd.f32 0.0, %v1164
          %v1166 = vpop.f32.mrb[0].mxu0
          %v1167 = vpop.f32.mrb[0].mxu0
          %v1168 = vpop.f32.mrb[0].mxu0
          %1169 = vdwg.mxu0
          %v1170 = vadd.f32 %v1121, %v1165
          %1171 = vst.msk [vmem:[#allocation7] sm:$0xff] %vm1043, %v1170
          %1172 = vst.msk [vmem:[#allocation5] sm:$0xff] %vm1113, %v1095
          %v1174 = vunpack.c.l.b16 %v1042
          %v1175 = vpack.c.b16 %v1174, %v1174
          %1176 = vrot.lane.b32.xlu0 %v1175, 112
          %v1177 = vpop.permute.xlu0 %1176
          %v1179 = vunpack.c.l.b16 %v1038
          %v1180 = vpack.c.b16 %v1179, %v1179
          %1181 = vrot.lane.b32.xlu0 %v1180, 112
          %v1182 = vpop.permute.xlu0 %1181
          %v1184 = vsel %vm1043, %v1177, 0
          %v1187 = vsel %vm1043, %v1182, 0
          %1189 = vmatprep.subr.bf16.mxu0 0
          %1190 = vmatpush1.bf16.xpose.msra.mxu0 %v1187
          %1191 = vmatprep.subr.bf16.mxu0 0
          %1192 = vmatpush1.bf16.xpose.msra.mxu0 0
          %1193 = vmatprep.subr.bf16.mxu0 0
          %1194 = vmatpush1.bf16.xpose.msra.mxu0 0
          %1195 = vmatprep.subr.bf16.mxu0 0
          %1196 = vmatpush1.bf16.xpose.msra.mxu0 0
          %1197 = vmatprep.subr.bf16.mxu0 0
          %1198 = vmatpush1.bf16.xpose.msra.mxu0 0
          %1199 = vmatprep.subr.bf16.mxu0 0
          %1200 = vmatpush1.bf16.xpose.msra.mxu0 0
          %1201 = vmatprep.subr.bf16.mxu0 0
          %1202 = vmatpush1.bf16.xpose.msra.mxu0 0
          %1203 = vmatprep.subr.bf16.mxu0 0
          %1204 = vmatpush1.bf16.xpose.msra.mxu0 0
          %1205 = vmatprep.subr.bf16.mxu0 0
          %1206 = vmatpush1.bf16.xpose.msra.mxu0 0
          %1207 = vmatprep.subr.bf16.mxu0 0
          %1208 = vmatpush1.bf16.xpose.msra.mxu0 0
          %1209 = vmatprep.subr.bf16.mxu0 0
          %1210 = vmatpush1.bf16.xpose.msra.mxu0 0
          %1211 = vmatprep.subr.bf16.mxu0 0
          %1212 = vmatpush1.bf16.xpose.msra.mxu0 0
          %1213 = vmatprep.subr.bf16.mxu0 0
          %1214 = vmatpush1.bf16.xpose.msra.mxu0 0
          %1215 = vmatprep.subr.bf16.mxu0 0
          %1216 = vmatpush1.bf16.xpose.msra.mxu0 0
          %1217 = vmatprep.subr.bf16.mxu0 0
          %1218 = vmatpush1.bf16.xpose.msra.mxu0 0
          %1219 = vmatprep.subr.bf16.mxu0 0
          %1220 = vmatpush1.bf16.xpose.msra.mxu0 0
          %1221 = vmatprep.mubr.bf16.mxu0 0
          %1222 = vmatmul.mubr.bf16.gmra.mrb[0].mxu0 %v1184
          %v1223 = vpop.f32.mrb[0].mxu0
          %v1224 = vadd.f32 0.0, %v1223
          %v1225 = vpop.f32.mrb[0].mxu0
          %v1226 = vpop.f32.mrb[0].mxu0
          %v1227 = vpop.f32.mrb[0].mxu0
          %1228 = vdwg.mxu0
          %s1229 = scalar_lea.vmem [#allocation5], 8
          %v1230 = vld [vmem:[%s1229] sm:$0xff]
          %v1231 = vsel %vm1091, %v1224, -inf
          %1232 = vmax.xlane.f32.xlu0 %v1231
          %v1233 = vpop.xlane.xlu0 %1232
          %v1234 = vmax.f32 %v1230, %v1233
          %v1235 = vsub.f32 %v1230, %v1234
          %v1236 = vmul.f32 %v1235, 1.442695
          %v1237 = vpow.pop %v1236
          %1239 = vset.pattern.permute.xlu0 0
          %1240 = vperm.xlu0 %1239, %v1234
          %v1241 = vpop.permute.xlu0 %1240
          %v1243 = vsub.f32 %v1224, %v1241
          %v1244 = vmul.f32 %v1243, 1.442695
          %v1245 = vpow.pop %v1244
          %s1246 = scalar_lea.vmem [#allocation6], 8
          %v1247 = vld [vmem:[%s1246] sm:$0xff]
          %v1248 = vmul.f32 %v1237, %v1247
          %v1249 = vsel %vm1091, %v1245, 0.0
          %1250 = vadd.xlane.f32.xlu0 %v1249
          %v1251 = vpop.xlane.xlu0 %1250
          %v1252 = vadd.f32 %v1248, %v1251
          %1253 = vst.msk [vmem:[%s1246] sm:$0xff] %vm1113, %v1252
          %s1254 = scalar_lea.vmem [#allocation7], 8
          %v1255 = vld [vmem:[%s1254] sm:$0xff]
          %1257 = vset.pattern.permute.xlu0 0
          %1258 = vperm.xlu0 %1257, %v1237
          %v1259 = vpop.permute.xlu0 %1258
          %v1261 = vmul.f32 %v1259, %v1255
          %v1262 = vpack.c.bf16 %v1245, %v1245
          %v1264 = vunpack.c.l.b16 %v1041
          %v1265 = vpack.c.b16 %v1264, %v1264
          %1266 = vrot.lane.b32.xlu0 %v1265, 112
          %v1267 = vpop.permute.xlu0 %1266
          %v1269 = vsel %vm1091, %v1262, 0
          %v1272 = vsel %vm1126, %v1267, 0
          %1274 = vmatprep.subr.bf16.mxu0 0
          %1275 = vmatpush1.bf16.msra.mxu0 %v1272
          %1276 = vmatprep.subr.bf16.mxu0 0
          %1277 = vmatpush1.bf16.msra.mxu0 0
          %1278 = vmatprep.subr.bf16.mxu0 0
          %1279 = vmatpush1.bf16.msra.mxu0 0
          %1280 = vmatprep.subr.bf16.mxu0 0
          %1281 = vmatpush1.bf16.msra.mxu0 0
          %1282 = vmatprep.subr.bf16.mxu0 0
          %1283 = vmatpush1.bf16.msra.mxu0 0
          %1284 = vmatprep.subr.bf16.mxu0 0
          %1285 = vmatpush1.bf16.msra.mxu0 0
          %1286 = vmatprep.subr.bf16.mxu0 0
          %1287 = vmatpush1.bf16.msra.mxu0 0
          %1288 = vmatprep.subr.bf16.mxu0 0
          %1289 = vmatpush1.bf16.msra.mxu0 0
          %1290 = vmatprep.subr.bf16.mxu0 0
          %1291 = vmatpush1.bf16.msra.mxu0 0
          %1292 = vmatprep.subr.bf16.mxu0 0
          %1293 = vmatpush1.bf16.msra.mxu0 0
          %1294 = vmatprep.subr.bf16.mxu0 0
          %1295 = vmatpush1.bf16.msra.mxu0 0
          %1296 = vmatprep.subr.bf16.mxu0 0
          %1297 = vmatpush1.bf16.msra.mxu0 0
          %1298 = vmatprep.subr.bf16.mxu0 0
          %1299 = vmatpush1.bf16.msra.mxu0 0
          %1300 = vmatprep.subr.bf16.mxu0 0
          %1301 = vmatpush1.bf16.msra.mxu0 0
          %1302 = vmatprep.subr.bf16.mxu0 0
          %1303 = vmatpush1.bf16.msra.mxu0 0
          %1304 = vmatprep.subr.bf16.mxu0 0
          %1305 = vmatpush1.bf16.msra.mxu0 0
          %1306 = vmatprep.mubr.bf16.mxu0 0
          %1307 = vmatmul.mubr.bf16.gmra.mrb[0].mxu0 %v1269
          %v1308 = vpop.f32.mrb[0].mxu0
          %v1309 = vadd.f32 0.0, %v1308
          %v1310 = vpop.f32.mrb[0].mxu0
          %v1311 = vpop.f32.mrb[0].mxu0
          %v1312 = vpop.f32.mrb[0].mxu0
          %1313 = vdwg.mxu0
          %v1314 = vadd.f32 %v1261, %v1309
          %1315 = vst.msk [vmem:[%s1254] sm:$0xff] %vm1043, %v1314
          %1316 = vst.msk [vmem:[%s1229] sm:$0xff] %vm1113, %v1234
        $region96: #{tpu_custom_call.1} parent=63 // pred_fallthru
          _
        %p1317 = scmp.eq.s32.totalorder %s506, 0
        // Predicated region
        $region97: #{tpu_custom_call.1} parent=63 // pred_check
          %p1318 = pneg %p1317
        $region98: #{tpu_custom_call.1} parent=63 // pred_check_branch
          %1320 = sbr.rel (%p1318) target = $region100
        $region99: #{tpu_custom_call.1} parent=63 // pred_region
          %v1321 = vld [vmem:[#allocation6] sm:$0xff]
          %v1322 = vrcp.pop %v1321
          %v1323 = vld [vmem:[#allocation7] sm:$0xff]
          %1325 = vset.pattern.permute.xlu0 0
          %1326 = vperm.xlu0 %1325, %v1322
          %v1327 = vpop.permute.xlu0 %1326
          %v1329 = vmul.f32 %v1323, %v1327
          %v1330 = vpack.c.bf16 %v1329, %v1329
          %s1331 = scalar_lea.vmem [#allocation6], 8
          %v1332 = vld [vmem:[%s1331] sm:$0xff]
          %v1333 = vrcp.pop %v1332
          %s1334 = scalar_lea.vmem [#allocation7], 8
          %v1335 = vld [vmem:[%s1334] sm:$0xff]
          %1337 = vset.pattern.permute.xlu0 0
          %1338 = vperm.xlu0 %1337, %v1333
          %v1339 = vpop.permute.xlu0 %1338
          %v1341 = vmul.f32 %v1335, %v1339
          %v1342 = vpack.c.bf16 %v1341, %v1341
          %1344 = vrot.lane.b32.xlu0 %v1342, 16
          %v1345 = vpop.permute.xlu0 %1344
          %vm1346 = vcmask 130048
          %v1349 = vsel %vm1346, %v1330, %v1345
          %v1350 = vld [vmem:[%s11] sm:$0xf]
          %v1351 = vld [vmem:[%s11 + $0x4] sm:$0xf]
          %v1352 = vld [vmem:[%s11 + $0x8] sm:$0xf]
          %v1353 = vld [vmem:[%s11 + $0xc] sm:$0xf]
          %v1354 = vld [vmem:[%s12] sm:$0x1]
          %v1356 = vlaneseq
          %v1357 = vshrl.u32 %v1356, 7
          %v1358 = vsub.s32 0, %v1357
          %v1359 = vrot.slane %v1354, %v1358
          %v1365 = vunpack.c.l.b16 %v1350
          %v1366 = vunpack.c.l.b16 %v1351
          %v1367 = vunpack.c.l.b16 %v1352
          %v1368 = vunpack.c.l.b16 %v1353
          %v1369 = vpack.c.b16 %v1366, %v1365
          %v1370 = vpack.c.b16 %v1368, %v1367
          %vm1373 = vcmask 261120
          %v1374 = vsel %vm1373, %v1349, 0
          %1376 = vmatprep.subr.bf16.mxu0 0
          %1377 = vmatpush1.bf16.msra.mxu0 %v1369
          %1378 = vmatprep.subr.bf16.mxu0 0
          %1379 = vmatpush1.bf16.msra.mxu0 %v1370
          %1380 = vmatprep.subr.bf16.mxu0 0
          %1381 = vmatpush1.bf16.msra.mxu0 0
          %1382 = vmatprep.subr.bf16.mxu0 0
          %1383 = vmatpush1.bf16.msra.mxu0 0
          %1384 = vmatprep.subr.bf16.mxu0 0
          %1385 = vmatpush1.bf16.msra.mxu0 0
          %1386 = vmatprep.subr.bf16.mxu0 0
          %1387 = vmatpush1.bf16.msra.mxu0 0
          %1388 = vmatprep.subr.bf16.mxu0 0
          %1389 = vmatpush1.bf16.msra.mxu0 0
          %1390 = vmatprep.subr.bf16.mxu0 0
          %1391 = vmatpush1.bf16.msra.mxu0 0
          %1392 = vmatprep.subr.bf16.mxu0 0
          %1393 = vmatpush1.bf16.msra.mxu0 0
          %1394 = vmatprep.subr.bf16.mxu0 0
          %1395 = vmatpush1.bf16.msra.mxu0 0
          %1396 = vmatprep.subr.bf16.mxu0 0
          %1397 = vmatpush1.bf16.msra.mxu0 0
          %1398 = vmatprep.subr.bf16.mxu0 0
          %1399 = vmatpush1.bf16.msra.mxu0 0
          %1400 = vmatprep.subr.bf16.mxu0 0
          %1401 = vmatpush1.bf16.msra.mxu0 0
          %1402 = vmatprep.subr.bf16.mxu0 0
          %1403 = vmatpush1.bf16.msra.mxu0 0
          %1404 = vmatprep.subr.bf16.mxu0 0
          %1405 = vmatpush1.bf16.msra.mxu0 0
          %1406 = vmatprep.subr.bf16.mxu0 0
          %1407 = vmatpush1.bf16.msra.mxu0 0
          %1408 = vmatprep.mubr.bf16.mxu0 0
          %1409 = vmatmul.mubr.bf16.gmra.mrb[0].mxu0 %v1374
          %v1410 = vpop.f32.mrb[0].mxu0
          %v1411 = vadd.f32 %v1359, %v1410
          %v1412 = vpop.f32.mrb[0].mxu0
          %v1413 = vpop.f32.mrb[0].mxu0
          %v1414 = vpop.f32.mrb[0].mxu0
          %1415 = vdwg.mxu0
          %1416 = vst.msk [vmem:[%s501] sm:$0xff] %vm1373, %v1411
        $region100: #{tpu_custom_call.1} parent=63 // pred_fallthru
          _
        %s1417 = sand.u32 %s305, 1
        %s1418 = scalar_lea.sflag [#allocation13], %s1417
        %s1419 = sand.u32 %s305, 1
        %s1420 = smul.addr %s1419, 8
        %s1421 = scalar_lea.vmem [#allocation22], %s1420
        // Predicated region
        $region101: #{tpu_custom_call.1} parent=63 // pred_check
          %p1422 = pneg %p315
        $region102: #{tpu_custom_call.1} parent=63 // pred_check_branch
          %1424 = sbr.rel (%p1422) target = $region104
        $region103: #{tpu_custom_call.1} parent=63 // pred_region
          %s1425 = sld [smem:[#allocation9 + %s46]]
          %s1427 = ssub.s32 128, 128
          %1428 = vsyncadd %s1418, %s1427
          %s1429 = smul.addr %s45, 4
          %s1430 = sadd.s32 %s1425, %s1429
          %s1431 = smul.addr %s1430, 128
          %s1432 = scalar_lea.hbm %s13, %s1431
          %s1434 = sshll.u32 %s1421, 4
          %s1435 = int_to_ptr.vmem [resolvable:$true] %s1434
          %1437 = dma.vmem_to_hbm [thread:$0]  %s1435, 128, %s1432, %s1418
        $region104: #{tpu_custom_call.1} parent=63 // pred_fallthru
          _
      $region64: #{tpu_custom_call.1} parent=5 // pred_fallthru
        _
      %p1438 = scmp.le.s32.totalorder 2, %s36
      // Predicated region
      $region105: #{tpu_custom_call.1} parent=5 // pred_check
        %p1439 = pneg %p1438
      $region106: #{tpu_custom_call.1} parent=5 // pred_check_branch
        %1441 = sbr.rel (%p1439) target = $region108
      $region107: #{tpu_custom_call.1} parent=5 // pred_region
        %s1442 = ssub.s32 %s36, 2
        // Predicated region
        $region109: #{tpu_custom_call.1} parent=107 // pred_check
          %p1443 = pneg %p321
        $region110: #{tpu_custom_call.1} parent=107 // pred_check_branch
          %1445 = sbr.rel (%p1443) target = $region112
        $region111: #{tpu_custom_call.1} parent=107 // pred_region
          %s1446 = sand.u32 %s306, 1
          %s1447 = scalar_lea.sflag [#allocation13], %s1446
          %s1448 = sand.u32 %s306, 1
          %s1449 = smul.addr %s1448, 8
          %s1450 = scalar_lea.vmem [#allocation22], %s1449
          %1451 = dma.done %s1447, 128
        $region112: #{tpu_custom_call.1} parent=107 // pred_fallthru
          _
      $region108: #{tpu_custom_call.1} parent=5 // pred_fallthru
        _
    $region6: #{tpu_custom_call.1} parent=1 // loop_footer
      %s40 = sadd.s32 1, %s36
    $region7: #{tpu_custom_call.1} parent=1 // loop_footer_branch
      %35 = sbr.rel target = $region3
    $region8: #{tpu_custom_call.1} parent=1 // loop_exit
      _
    %1452 = vsyncpa [#allocation12], 1
    %s1453 = scalar_lea.sflag [#allocation12], 1
    %1454 = vsyncpa %s1453, 1
    %1455 = vsyncpa [#allocation15], 1
    %1456 = vsyncpa [#allocation18], 1
    %1457 = vsyncpa [#allocation21], 1
    %1458 = vsyncpa [#allocation13], 1
    %s1459 = scalar_lea.sflag [#allocation13], 1
    %1460 = vsyncpa %s1459, 1

</llo_original>
